<compile_context>
chip_gen: v7x
topology: tpu7x:2x2x1
jax: 0.10.0
libtpu: 0.0.40
codegen_flags: <defaults>
</compile_context>

<pallas_src>
import jax
import jax.numpy as jnp
import numpy as np
from jax.experimental import pallas as pl
from jax.experimental.pallas import tpu as pltpu

EPS = 1e-5  # torch BatchNorm2d default eps


# ---------------------------------------------------------------------------
# small in-kernel helpers (f32 elementwise math; v5e has no bf16 VPU/EUP)
# ---------------------------------------------------------------------------
def _gelu(x):
    return jax.nn.gelu(x, approximate=True)


def _silu(x):
    return x * jax.nn.sigmoid(x)


def _bn_train(x, gamma, beta):
    # training-mode BatchNorm2d in channel-major layout: per-channel (sublane
    # row) biased batch statistics over all lanes (batch*spatial).
    m = jnp.mean(x, axis=1, keepdims=True)
    v = jnp.maximum(jnp.mean(x * x, axis=1, keepdims=True) - m * m, 0.0)
    return (x - m) * jax.lax.rsqrt(v + EPS) * gamma + beta


# ---------------------------------------------------------------------------
# the single fused kernel
# ---------------------------------------------------------------------------
def fused_forward_kernel(
    img_ref,      # (B, C_in, H*W)   bf16  NCHW image (contiguous reshape only)
    text_ref,     # (dim, B)         f32   conditioning, channel-major
    sstack_ref,   # (9*H*W, Ho*Wo)   bf16  per-batch im2col selection, taps on K
    bsel_nb_ref,  # (N2, B)          bf16  0/1 batch membership (SE pooling)
    bsel_bn_ref,  # (B, N2)          f32   0/1 batch membership (broadcasts)
    w1t_ref,      # (hidden, C_in)   bf16  expansion 1x1 conv weight (transposed)
    g1_ref, be1_ref,        # (hidden, 1) f32
    wdw_ref,                # (hidden, 9) f32     depthwise 3x3 weight
    g2_ref, be2_ref,        # (hidden, 1) f32
    wse1_ref,               # (se_h, hidden) bf16
    wse2_ref,               # (hidden, se_h) bf16
    wpw2_ref,               # (dim, hidden)  bf16 projection 1x1 conv weight
    g3_ref, be3_ref,        # (dim, 1) f32
    wf1_ref, bf1_ref,       # (film_h, dim) bf16 / (film_h, 1) f32
    wf2_ref, bf2_ref,       # (2*dim, film_h) bf16 / (2*dim, 1) f32
    wproj_ref,              # (in_ch, out_ch) bf16
    bproj_ref,              # (1, out_ch) f32
    o_ref,                  # (B, out_ch) f32
):
    f32, bf16 = jnp.float32, jnp.bfloat16
    B, _, HW = img_ref.shape
    hidden = w1t_ref.shape[0]
    HWo = sstack_ref.shape[1]
    dim = wpw2_ref.shape[0]

    # ---- MBConv: 1x1 expansion conv + BN(train) + GELU (channel-major) ------
    # conv bias dropped: exact no-op under the training-mode BN that follows.
    x = jnp.concatenate([img_ref[b] for b in range(B)], axis=1)       # (Cin, B*HW)
    y1 = jnp.dot(w1t_ref[...], x, preferred_element_type=f32)         # (hidden, B*HW)
    y1 = _gelu(_bn_train(y1, g1_ref[...], be1_ref[...]))

    # ---- depthwise 3x3 stride-2 pad-1: one long-K matmul ---------------------
    # taps stacked along K with depthwise weights pre-folded (VPU); per-batch
    # selection applied by a static B loop (no O(B^2) block-diagonal).
    wdw = wdw_ref[...]                                                 # (hidden, 9)
    stacks = []
    for b in range(B):
        y1b = y1[:, b * HW:(b + 1) * HW]
        stacks.append(jnp.concatenate(
            [y1b * wdw[:, k:k + 1] for k in range(9)], axis=1))        # (hidden, 9*HW)
    ys = jnp.concatenate(stacks, axis=0).astype(bf16)                  # (B*hidden, 9*HW)
    y2s = jnp.dot(ys, sstack_ref[...], preferred_element_type=f32)     # (B*hidden, HWo)
    y2 = jnp.concatenate(
        [y2s[b * hidden:(b + 1) * hidden] for b in range(B)], axis=1)  # (hidden, N2)
    y2 = _gelu(_bn_train(y2, g2_ref[...], be2_ref[...]))

    # ---- Squeeze-Excitation (spatial mean via 0/1 matmul, f32 1/HWo scale) ---
    pooled = jnp.dot(y2.astype(bf16), bsel_nb_ref[...],
                     preferred_element_type=f32) * (1.0 / HWo)         # (hidden, B)
    s1 = _silu(jnp.dot(wse1_ref[...], pooled.astype(bf16),
                       preferred_element_type=f32))                    # (se_h, B)
    gate = jax.nn.sigmoid(jnp.dot(wse2_ref[...], s1.astype(bf16),
                                  preferred_element_type=f32))         # (hidden, B)

    # ---- FiLM scale/shift from text (single wf2 operand) ---------------------
    ht = _silu(jnp.dot(wf1_ref[...], text_ref[...].astype(bf16),
                       preferred_element_type=f32) + bf1_ref[...])     # (film_h, B)
    sst = jnp.dot(wf2_ref[...], ht.astype(bf16),
                  preferred_element_type=f32) + bf2_ref[...]           # (2*dim, B)

    # ---- ONE broadcast matmul for SE gate + FiLM scale + FiLM shift ----------
    bc = jnp.dot(jnp.concatenate([gate, sst], axis=0), bsel_bn_ref[...],
                 preferred_element_type=f32)                           # (hidden+2*dim, N2)
    gate_b = bc[0:hidden]
    scale_b = bc[hidden:hidden + dim]
    shift_b = bc[hidden + dim:hidden + 2 * dim]

    # ---- 1x1 projection conv + BN (bias BN-cancelled), then FiLM -------------
    z = jnp.dot(wpw2_ref[...], (y2 * gate_b).astype(bf16),
                preferred_element_type=f32)                            # (dim, N2)
    z = _bn_train(z, g3_ref[...], be3_ref[...])
    y3 = z * (scale_b + 1.0) + shift_b                                 # (dim, N2)

    # ---- flatten in exact torch NCHW (c, ho, wo) order + proj Linear ---------
    flat = jnp.concatenate(
        [jnp.concatenate([y3[c:c + 1, b * HWo:(b + 1) * HWo] for c in range(dim)],
                         axis=1)
         for b in range(B)], axis=0)                                   # (B, dim*HWo)
    o_ref[...] = (jnp.dot(flat.astype(bf16), wproj_ref[...],
                          preferred_element_type=f32) + bproj_ref[...])


# ---------------------------------------------------------------------------
# forward wrapper: free reshape + bf16 cast of the image, then one pallas_call
# ---------------------------------------------------------------------------
@jax.jit
def film_efficientnet_b3(kparams, text, img):
    B, C, H, W = img.shape
    img_flat = img.astype(jnp.bfloat16).reshape(B, C, H * W)   # contiguous -> free reshape
    text_t = text.astype(jnp.float32).T                        # (dim, B), tiny
    out_ch = kparams["b_proj"].shape[1]

    args = (
        img_flat, text_t,
        kparams["sstack"], kparams["bsel_nb"], kparams["bsel_bn"],
        kparams["w1t"], kparams["g_bn1"], kparams["be_bn1"],
        kparams["w_dw"], kparams["g_bn2"], kparams["be_bn2"],
        kparams["w_se1t"], kparams["w_se2t"],
        kparams["w_pw2t"], kparams["g_bn3"], kparams["be_bn3"],
        kparams["w_f1t"], kparams["b_f1t"], kparams["w_f2t"], kparams["b_f2t"],
        kparams["w_proj"], kparams["b_proj"],
    )
    vmem = pl.BlockSpec(memory_space=pltpu.MemorySpace.VMEM)
    return pl.pallas_call(
        fused_forward_kernel,
        out_shape=jax.ShapeDtypeStruct((B, out_ch), jnp.float32),
        in_specs=[vmem] * len(args),
        out_specs=vmem,
        compiler_params=pltpu.CompilerParams(vmem_limit_bytes=32 * 1024 * 1024),
    )(*args)


# ---------------------------------------------------------------------------
# one-time packing of module params into kernel-ready layout/dtype, plus the
# tiny constant selection / membership matrices.
# ---------------------------------------------------------------------------
def prepare_params(params, *, B, H, W, stride):
    f32, bf16 = jnp.float32, jnp.bfloat16
    c_in, hidden = params["w_pw1"].shape
    dim = params["w_pw2"].shape[1]
    film_h = params["w_f1"].shape[1]
    Ho = (H + 2 - 3) // stride + 1
    Wo = (W + 2 - 3) // stride + 1
    HW, HWo = H * W, Ho * Wo
    N2 = B * HWo                     # stage-2 lanes, batch-major (b*HWo + s)

    # per-batch im2col selection, 9 taps stacked along K (pad+stride baked in)
    sstack = np.zeros((9 * HW, HWo), np.float32)
    for ky in range(3):
        for kx in range(3):
            k = ky * 3 + kx
            for ho in range(Ho):
                for wo in range(Wo):
                    h = ho * stride - 1 + ky
                    w = wo * stride - 1 + kx
                    if 0 <= h < H and 0 <= w < W:
                        sstack[k * HW + h * W + w, ho * Wo + wo] = 1.0

    # 0/1 batch-membership matrix (used for SE pooling and the broadcasts)
    bsel_bn = np.zeros((B, N2), np.float32)
    for b in range(B):
        bsel_bn[b, b * HWo:(b + 1) * HWo] = 1.0

    return dict(
        sstack=jnp.asarray(sstack, bf16),
        bsel_nb=jnp.asarray(bsel_bn.T, bf16),
        bsel_bn=jnp.asarray(bsel_bn, f32),
        w1t=params["w_pw1"].T.astype(bf16),
        g_bn1=params["g_bn1"].reshape(hidden, 1).astype(f32),
        be_bn1=params["be_bn1"].reshape(hidden, 1).astype(f32),
        w_dw=params["w_dw"].astype(f32),
        g_bn2=params["g_bn2"].reshape(hidden, 1).astype(f32),
        be_bn2=params["be_bn2"].reshape(hidden, 1).astype(f32),
        w_se1t=params["w_se1"].T.astype(bf16),
        w_se2t=params["w_se2"].T.astype(bf16),
        w_pw2t=params["w_pw2"].T.astype(bf16),
        g_bn3=params["g_bn3"].reshape(dim, 1).astype(f32),
        be_bn3=params["be_bn3"].reshape(dim, 1).astype(f32),
        w_f1t=params["w_f1"].T.astype(bf16),
        b_f1t=params["b_f1"].reshape(film_h, 1).astype(f32),
        w_f2t=params["w_f2"].T.astype(bf16),
        b_f2t=params["b_f2"].reshape(2 * dim, 1).astype(f32),
        w_proj=params["w_proj"].astype(bf16),
        b_proj=params["b_proj"].astype(f32),
    )


# ---------------------------------------------------------------------------
# deterministic synthetic parameters (shapes follow the module's __init__).
# conv biases of pw1/dw/pw2 are omitted: exact no-ops under train-mode BN.
# ---------------------------------------------------------------------------
def init_params(key, *, in_channels, dim, out_channels, expanse_ratio):
    hidden = 4 * dim                        # MBConv expansion_rate = 4
    se_hidden = int(hidden * 0.25)          # shrinkage_rate = 0.25
    film_hidden = (dim * expanse_ratio) * expanse_ratio
    ks = jax.random.split(key, 17)
    n = lambda k, s, sc=0.1: (sc * jax.random.normal(k, s)).astype(jnp.float32)
    return dict(
        w_pw1=n(ks[0], (in_channels, hidden)),
        g_bn1=1.0 + n(ks[1], (1, hidden)),  be_bn1=n(ks[2], (1, hidden)),
        w_dw=n(ks[3], (hidden, 9)),
        g_bn2=1.0 + n(ks[4], (1, hidden)),  be_bn2=n(ks[5], (1, hidden)),
        w_se1=n(ks[6], (hidden, se_hidden)), w_se2=n(ks[7], (se_hidden, hidden)),
        w_pw2=n(ks[8], (hidden, dim)),
        g_bn3=1.0 + n(ks[9], (1, dim)),     be_bn3=n(ks[10], (1, dim)),
        w_f1=n(ks[11], (dim, film_hidden)), b_f1=n(ks[12], (1, film_hidden)),
        w_f2=n(ks[13], (film_hidden, 2 * dim)), b_f2=n(ks[14], (1, 2 * dim)),
        w_proj=n(ks[15], (in_channels, out_channels)),
        b_proj=n(ks[16], (1, out_channels)),
    )


if __name__ == "__main__":
    B = 2
    in_channels = 64
    dim = 4
    out_channels = 8
    expanse_ratio = 4
    downsample = 1                 # -> depthwise stride 2
    H = W = 8
    stride = 2 if downsample else 1
    Ho = (H + 2 - 3) // stride + 1
    Wo = (W + 2 - 3) // stride + 1
    # shapes chosen so x.view(B, -1) has exactly `in_channels` features, matching
    # the reference proj = nn.Linear(in_channels, out_channels)
    assert Ho * Wo * dim == in_channels

    key = jax.random.PRNGKey(0)
    kp, kt, ki = jax.random.split(key, 3)
    params = init_params(kp, in_channels=in_channels, dim=dim,
                         out_channels=out_channels, expanse_ratio=expanse_ratio)
    kparams = prepare_params(params, B=B, H=H, W=W, stride=stride)
    text = jax.random.normal(kt, (B, dim), jnp.float32)
    img = jax.random.normal(ki, (B, in_channels, H, W), jnp.float32)

    out = film_efficientnet_b3(kparams, text, img)
    out = jax.block_until_ready(out)
    assert out.shape == (B, out_channels)
    assert bool(jnp.all(jnp.isfinite(out)))
    print("KERNEL_OK")
</pallas_src>

<mosaic_0001>
module attributes {stable_mosaic.version = 11 : i64} {
  func.func @fused_forward_kernel(%arg0: memref<2x64x64xbf16, #tpu.memory_space<vmem>>, %arg1: memref<4x2xf32, #tpu.memory_space<vmem>>, %arg2: memref<576x16xbf16, #tpu.memory_space<vmem>>, %arg3: memref<32x2xbf16, #tpu.memory_space<vmem>>, %arg4: memref<2x32xf32, #tpu.memory_space<vmem>>, %arg5: memref<16x64xbf16, #tpu.memory_space<vmem>>, %arg6: memref<16x1xf32, #tpu.memory_space<vmem>>, %arg7: memref<16x1xf32, #tpu.memory_space<vmem>>, %arg8: memref<16x9xf32, #tpu.memory_space<vmem>>, %arg9: memref<16x1xf32, #tpu.memory_space<vmem>>, %arg10: memref<16x1xf32, #tpu.memory_space<vmem>>, %arg11: memref<4x16xbf16, #tpu.memory_space<vmem>>, %arg12: memref<16x4xbf16, #tpu.memory_space<vmem>>, %arg13: memref<4x16xbf16, #tpu.memory_space<vmem>>, %arg14: memref<4x1xf32, #tpu.memory_space<vmem>>, %arg15: memref<4x1xf32, #tpu.memory_space<vmem>>, %arg16: memref<64x4xbf16, #tpu.memory_space<vmem>>, %arg17: memref<64x1xf32, #tpu.memory_space<vmem>>, %arg18: memref<8x64xbf16, #tpu.memory_space<vmem>>, %arg19: memref<8x1xf32, #tpu.memory_space<vmem>>, %arg20: memref<64x8xbf16, #tpu.memory_space<vmem>>, %arg21: memref<1x8xf32, #tpu.memory_space<vmem>>, %arg22: memref<2x8xf32, #tpu.memory_space<vmem>>) attributes {dimension_semantics = [], scalar_prefetch = 0 : i64, scratch_operands = 0 : i64, tpu.core_type = #tpu.core_type<tc>} {
    %c0 = arith.constant 0 : index
    %c0_0 = arith.constant 0 : index
    %c0_1 = arith.constant 0 : index
    %0 = vector.load %arg0[%c0, %c0_0, %c0_1] : memref<2x64x64xbf16, #tpu.memory_space<vmem>>, vector<1x64x64xbf16>
    %1 = vector.shape_cast %0 : vector<1x64x64xbf16> to vector<64x64xbf16>
    %c1 = arith.constant 1 : index
    %c0_2 = arith.constant 0 : index
    %c0_3 = arith.constant 0 : index
    %2 = vector.load %arg0[%c1, %c0_2, %c0_3] : memref<2x64x64xbf16, #tpu.memory_space<vmem>>, vector<1x64x64xbf16>
    %3 = vector.shape_cast %2 : vector<1x64x64xbf16> to vector<64x64xbf16>
    %4 = tpu.concatenate %1, %3 in 1 : vector<64x64xbf16>, vector<64x64xbf16> -> vector<64x128xbf16>
    %c0_4 = arith.constant 0 : index
    %c0_5 = arith.constant 0 : index
    %5 = vector.load %arg5[%c0_4, %c0_5] : memref<16x64xbf16, #tpu.memory_space<vmem>>, vector<16x64xbf16>
    %cst = arith.constant dense<0.000000e+00> : vector<16x128xf32>
    %6 = tpu.matmul %5, %4, %cst {dimension_numbers = #tpu.dot_dimension_numbers<[1], [0], [0], [1], [0, 0, 1, 1], [], []>} : vector<16x64xbf16>, vector<64x128xbf16>, vector<16x128xf32> -> vector<16x128xf32>
    %c0_6 = arith.constant 0 : index
    %c0_7 = arith.constant 0 : index
    %7 = vector.load %arg6[%c0_6, %c0_7] : memref<16x1xf32, #tpu.memory_space<vmem>>, vector<16x1xf32>
    %c0_8 = arith.constant 0 : index
    %c0_9 = arith.constant 0 : index
    %8 = vector.load %arg7[%c0_8, %c0_9] : memref<16x1xf32, #tpu.memory_space<vmem>>, vector<16x1xf32>
    %cst_10 = arith.constant dense<0.000000e+00> : vector<16xf32>
    %9 = vector.multi_reduction <add>, %6, %cst_10 [1] : vector<16x128xf32> to vector<16xf32>
    %10 = vector.shape_cast %9 : vector<16xf32> to vector<16x1xf32>
    %cst_11 = arith.constant 1.280000e+02 : f32
    %11 = vector.broadcast %cst_11 : f32 to vector<16x1xf32>
    %12 = arith.divf %10, %11 : vector<16x1xf32>
    %13 = arith.mulf %6, %6 : vector<16x128xf32>
    %cst_12 = arith.constant dense<0.000000e+00> : vector<16xf32>
    %14 = vector.multi_reduction <add>, %13, %cst_12 [1] : vector<16x128xf32> to vector<16xf32>
    %15 = vector.shape_cast %14 : vector<16xf32> to vector<16x1xf32>
    %cst_13 = arith.constant 1.280000e+02 : f32
    %16 = vector.broadcast %cst_13 : f32 to vector<16x1xf32>
    %17 = arith.divf %15, %16 : vector<16x1xf32>
    %18 = arith.mulf %12, %12 : vector<16x1xf32>
    %19 = arith.subf %17, %18 : vector<16x1xf32>
    %cst_14 = arith.constant 0.000000e+00 : f32
    %20 = vector.broadcast %cst_14 : f32 to vector<16x1xf32>
    %21 = arith.maximumf %19, %20 : vector<16x1xf32>
    %22 = vector.broadcast %12 : vector<16x1xf32> to vector<16x128xf32>
    %23 = arith.subf %6, %22 : vector<16x128xf32>
    %cst_15 = arith.constant 9.99999974E-6 : f32
    %24 = vector.broadcast %cst_15 : f32 to vector<16x1xf32>
    %25 = arith.addf %21, %24 : vector<16x1xf32>
    %26 = math.rsqrt %25 : vector<16x1xf32>
    %27 = vector.broadcast %26 : vector<16x1xf32> to vector<16x128xf32>
    %28 = arith.mulf %23, %27 : vector<16x128xf32>
    %29 = vector.broadcast %7 : vector<16x1xf32> to vector<16x128xf32>
    %30 = arith.mulf %28, %29 : vector<16x128xf32>
    %31 = vector.broadcast %8 : vector<16x1xf32> to vector<16x128xf32>
    %32 = arith.addf %30, %31 : vector<16x128xf32>
    %33 = arith.mulf %32, %32 : vector<16x128xf32>
    %34 = arith.mulf %32, %33 : vector<16x128xf32>
    %cst_16 = arith.constant 4.471500e-02 : f32
    %35 = vector.broadcast %cst_16 : f32 to vector<16x128xf32>
    %36 = arith.mulf %35, %34 : vector<16x128xf32>
    %37 = arith.addf %32, %36 : vector<16x128xf32>
    %cst_17 = arith.constant 0.797884583 : f32
    %38 = vector.broadcast %cst_17 : f32 to vector<16x128xf32>
    %39 = arith.mulf %38, %37 : vector<16x128xf32>
    %40 = math.tanh %39 : vector<16x128xf32>
    %cst_18 = arith.constant 1.000000e+00 : f32
    %41 = vector.broadcast %cst_18 : f32 to vector<16x128xf32>
    %42 = arith.addf %41, %40 : vector<16x128xf32>
    %cst_19 = arith.constant 5.000000e-01 : f32
    %43 = vector.broadcast %cst_19 : f32 to vector<16x128xf32>
    %44 = arith.mulf %43, %42 : vector<16x128xf32>
    %45 = arith.mulf %32, %44 : vector<16x128xf32>
    %c0_20 = arith.constant 0 : index
    %c0_21 = arith.constant 0 : index
    %46 = vector.load %arg8[%c0_20, %c0_21] : memref<16x9xf32, #tpu.memory_space<vmem>>, vector<16x9xf32>
    %47 = vector.extract_strided_slice %45 {offsets = [0, 0], sizes = [16, 64], strides = [1, 1]} : vector<16x128xf32> to vector<16x64xf32>
    %48 = vector.extract_strided_slice %46 {offsets = [0, 0], sizes = [16, 1], strides = [1, 1]} : vector<16x9xf32> to vector<16x1xf32>
    %49 = vector.broadcast %48 : vector<16x1xf32> to vector<16x64xf32>
    %50 = arith.mulf %47, %49 : vector<16x64xf32>
    %51 = vector.extract_strided_slice %46 {offsets = [0, 1], sizes = [16, 1], strides = [1, 1]} : vector<16x9xf32> to vector<16x1xf32>
    %52 = vector.broadcast %51 : vector<16x1xf32> to vector<16x64xf32>
    %53 = arith.mulf %47, %52 : vector<16x64xf32>
    %54 = vector.extract_strided_slice %46 {offsets = [0, 2], sizes = [16, 1], strides = [1, 1]} : vector<16x9xf32> to vector<16x1xf32>
    %55 = vector.broadcast %54 : vector<16x1xf32> to vector<16x64xf32>
    %56 = arith.mulf %47, %55 : vector<16x64xf32>
    %57 = vector.extract_strided_slice %46 {offsets = [0, 3], sizes = [16, 1], strides = [1, 1]} : vector<16x9xf32> to vector<16x1xf32>
    %58 = vector.broadcast %57 : vector<16x1xf32> to vector<16x64xf32>
    %59 = arith.mulf %47, %58 : vector<16x64xf32>
    %60 = vector.extract_strided_slice %46 {offsets = [0, 4], sizes = [16, 1], strides = [1, 1]} : vector<16x9xf32> to vector<16x1xf32>
    %61 = vector.broadcast %60 : vector<16x1xf32> to vector<16x64xf32>
    %62 = arith.mulf %47, %61 : vector<16x64xf32>
    %63 = vector.extract_strided_slice %46 {offsets = [0, 5], sizes = [16, 1], strides = [1, 1]} : vector<16x9xf32> to vector<16x1xf32>
    %64 = vector.broadcast %63 : vector<16x1xf32> to vector<16x64xf32>
    %65 = arith.mulf %47, %64 : vector<16x64xf32>
    %66 = vector.extract_strided_slice %46 {offsets = [0, 6], sizes = [16, 1], strides = [1, 1]} : vector<16x9xf32> to vector<16x1xf32>
    %67 = vector.broadcast %66 : vector<16x1xf32> to vector<16x64xf32>
    %68 = arith.mulf %47, %67 : vector<16x64xf32>
    %69 = vector.extract_strided_slice %46 {offsets = [0, 7], sizes = [16, 1], strides = [1, 1]} : vector<16x9xf32> to vector<16x1xf32>
    %70 = vector.broadcast %69 : vector<16x1xf32> to vector<16x64xf32>
    %71 = arith.mulf %47, %70 : vector<16x64xf32>
    %72 = vector.extract_strided_slice %46 {offsets = [0, 8], sizes = [16, 1], strides = [1, 1]} : vector<16x9xf32> to vector<16x1xf32>
    %73 = vector.broadcast %72 : vector<16x1xf32> to vector<16x64xf32>
    %74 = arith.mulf %47, %73 : vector<16x64xf32>
    %75 = tpu.concatenate %50, %53, %56, %59, %62, %65, %68, %71, %74 in 1 : vector<16x64xf32>, vector<16x64xf32>, vector<16x64xf32>, vector<16x64xf32>, vector<16x64xf32>, vector<16x64xf32>, vector<16x64xf32>, vector<16x64xf32>, vector<16x64xf32> -> vector<16x576xf32>
    %76 = vector.extract_strided_slice %45 {offsets = [0, 64], sizes = [16, 64], strides = [1, 1]} : vector<16x128xf32> to vector<16x64xf32>
    %77 = vector.extract_strided_slice %46 {offsets = [0, 0], sizes = [16, 1], strides = [1, 1]} : vector<16x9xf32> to vector<16x1xf32>
    %78 = vector.broadcast %77 : vector<16x1xf32> to vector<16x64xf32>
    %79 = arith.mulf %76, %78 : vector<16x64xf32>
    %80 = vector.extract_strided_slice %46 {offsets = [0, 1], sizes = [16, 1], strides = [1, 1]} : vector<16x9xf32> to vector<16x1xf32>
    %81 = vector.broadcast %80 : vector<16x1xf32> to vector<16x64xf32>
    %82 = arith.mulf %76, %81 : vector<16x64xf32>
    %83 = vector.extract_strided_slice %46 {offsets = [0, 2], sizes = [16, 1], strides = [1, 1]} : vector<16x9xf32> to vector<16x1xf32>
    %84 = vector.broadcast %83 : vector<16x1xf32> to vector<16x64xf32>
    %85 = arith.mulf %76, %84 : vector<16x64xf32>
    %86 = vector.extract_strided_slice %46 {offsets = [0, 3], sizes = [16, 1], strides = [1, 1]} : vector<16x9xf32> to vector<16x1xf32>
    %87 = vector.broadcast %86 : vector<16x1xf32> to vector<16x64xf32>
    %88 = arith.mulf %76, %87 : vector<16x64xf32>
    %89 = vector.extract_strided_slice %46 {offsets = [0, 4], sizes = [16, 1], strides = [1, 1]} : vector<16x9xf32> to vector<16x1xf32>
    %90 = vector.broadcast %89 : vector<16x1xf32> to vector<16x64xf32>
    %91 = arith.mulf %76, %90 : vector<16x64xf32>
    %92 = vector.extract_strided_slice %46 {offsets = [0, 5], sizes = [16, 1], strides = [1, 1]} : vector<16x9xf32> to vector<16x1xf32>
    %93 = vector.broadcast %92 : vector<16x1xf32> to vector<16x64xf32>
    %94 = arith.mulf %76, %93 : vector<16x64xf32>
    %95 = vector.extract_strided_slice %46 {offsets = [0, 6], sizes = [16, 1], strides = [1, 1]} : vector<16x9xf32> to vector<16x1xf32>
    %96 = vector.broadcast %95 : vector<16x1xf32> to vector<16x64xf32>
    %97 = arith.mulf %76, %96 : vector<16x64xf32>
    %98 = vector.extract_strided_slice %46 {offsets = [0, 7], sizes = [16, 1], strides = [1, 1]} : vector<16x9xf32> to vector<16x1xf32>
    %99 = vector.broadcast %98 : vector<16x1xf32> to vector<16x64xf32>
    %100 = arith.mulf %76, %99 : vector<16x64xf32>
    %101 = vector.extract_strided_slice %46 {offsets = [0, 8], sizes = [16, 1], strides = [1, 1]} : vector<16x9xf32> to vector<16x1xf32>
    %102 = vector.broadcast %101 : vector<16x1xf32> to vector<16x64xf32>
    %103 = arith.mulf %76, %102 : vector<16x64xf32>
    %104 = tpu.concatenate %79, %82, %85, %88, %91, %94, %97, %100, %103 in 1 : vector<16x64xf32>, vector<16x64xf32>, vector<16x64xf32>, vector<16x64xf32>, vector<16x64xf32>, vector<16x64xf32>, vector<16x64xf32>, vector<16x64xf32>, vector<16x64xf32> -> vector<16x576xf32>
    %105 = tpu.concatenate %75, %104 in 0 : vector<16x576xf32>, vector<16x576xf32> -> vector<32x576xf32>
    %106 = arith.truncf %105 : vector<32x576xf32> to vector<32x576xbf16>
    %c0_22 = arith.constant 0 : index
    %c0_23 = arith.constant 0 : index
    %107 = vector.load %arg2[%c0_22, %c0_23] : memref<576x16xbf16, #tpu.memory_space<vmem>>, vector<576x16xbf16>
    %cst_24 = arith.constant dense<0.000000e+00> : vector<32x16xf32>
    %108 = tpu.matmul %106, %107, %cst_24 {dimension_numbers = #tpu.dot_dimension_numbers<[1], [0], [0], [1], [0, 0, 1, 1], [], []>} : vector<32x576xbf16>, vector<576x16xbf16>, vector<32x16xf32> -> vector<32x16xf32>
    %109 = vector.extract_strided_slice %108 {offsets = [0, 0], sizes = [16, 16], strides = [1, 1]} : vector<32x16xf32> to vector<16x16xf32>
    %110 = vector.extract_strided_slice %108 {offsets = [16, 0], sizes = [16, 16], strides = [1, 1]} : vector<32x16xf32> to vector<16x16xf32>
    %111 = tpu.concatenate %109, %110 in 1 : vector<16x16xf32>, vector<16x16xf32> -> vector<16x32xf32>
    %c0_25 = arith.constant 0 : index
    %c0_26 = arith.constant 0 : index
    %112 = vector.load %arg9[%c0_25, %c0_26] : memref<16x1xf32, #tpu.memory_space<vmem>>, vector<16x1xf32>
    %c0_27 = arith.constant 0 : index
    %c0_28 = arith.constant 0 : index
    %113 = vector.load %arg10[%c0_27, %c0_28] : memref<16x1xf32, #tpu.memory_space<vmem>>, vector<16x1xf32>
    %cst_29 = arith.constant dense<0.000000e+00> : vector<16xf32>
    %114 = vector.multi_reduction <add>, %111, %cst_29 [1] : vector<16x32xf32> to vector<16xf32>
    %115 = vector.shape_cast %114 : vector<16xf32> to vector<16x1xf32>
    %cst_30 = arith.constant 3.200000e+01 : f32
    %116 = vector.broadcast %cst_30 : f32 to vector<16x1xf32>
    %117 = arith.divf %115, %116 : vector<16x1xf32>
    %118 = arith.mulf %111, %111 : vector<16x32xf32>
    %cst_31 = arith.constant dense<0.000000e+00> : vector<16xf32>
    %119 = vector.multi_reduction <add>, %118, %cst_31 [1] : vector<16x32xf32> to vector<16xf32>
    %120 = vector.shape_cast %119 : vector<16xf32> to vector<16x1xf32>
    %cst_32 = arith.constant 3.200000e+01 : f32
    %121 = vector.broadcast %cst_32 : f32 to vector<16x1xf32>
    %122 = arith.divf %120, %121 : vector<16x1xf32>
    %123 = arith.mulf %117, %117 : vector<16x1xf32>
    %124 = arith.subf %122, %123 : vector<16x1xf32>
    %cst_33 = arith.constant 0.000000e+00 : f32
    %125 = vector.broadcast %cst_33 : f32 to vector<16x1xf32>
    %126 = arith.maximumf %124, %125 : vector<16x1xf32>
    %127 = vector.broadcast %117 : vector<16x1xf32> to vector<16x32xf32>
    %128 = arith.subf %111, %127 : vector<16x32xf32>
    %cst_34 = arith.constant 9.99999974E-6 : f32
    %129 = vector.broadcast %cst_34 : f32 to vector<16x1xf32>
    %130 = arith.addf %126, %129 : vector<16x1xf32>
    %131 = math.rsqrt %130 : vector<16x1xf32>
    %132 = vector.broadcast %131 : vector<16x1xf32> to vector<16x32xf32>
    %133 = arith.mulf %128, %132 : vector<16x32xf32>
    %134 = vector.broadcast %112 : vector<16x1xf32> to vector<16x32xf32>
    %135 = arith.mulf %133, %134 : vector<16x32xf32>
    %136 = vector.broadcast %113 : vector<16x1xf32> to vector<16x32xf32>
    %137 = arith.addf %135, %136 : vector<16x32xf32>
    %138 = arith.mulf %137, %137 : vector<16x32xf32>
    %139 = arith.mulf %137, %138 : vector<16x32xf32>
    %cst_35 = arith.constant 4.471500e-02 : f32
    %140 = vector.broadcast %cst_35 : f32 to vector<16x32xf32>
    %141 = arith.mulf %140, %139 : vector<16x32xf32>
    %142 = arith.addf %137, %141 : vector<16x32xf32>
    %cst_36 = arith.constant 0.797884583 : f32
    %143 = vector.broadcast %cst_36 : f32 to vector<16x32xf32>
    %144 = arith.mulf %143, %142 : vector<16x32xf32>
    %145 = math.tanh %144 : vector<16x32xf32>
    %cst_37 = arith.constant 1.000000e+00 : f32
    %146 = vector.broadcast %cst_37 : f32 to vector<16x32xf32>
    %147 = arith.addf %146, %145 : vector<16x32xf32>
    %cst_38 = arith.constant 5.000000e-01 : f32
    %148 = vector.broadcast %cst_38 : f32 to vector<16x32xf32>
    %149 = arith.mulf %148, %147 : vector<16x32xf32>
    %150 = arith.mulf %137, %149 : vector<16x32xf32>
    %151 = arith.truncf %150 : vector<16x32xf32> to vector<16x32xbf16>
    %c0_39 = arith.constant 0 : index
    %c0_40 = arith.constant 0 : index
    %152 = vector.load %arg3[%c0_39, %c0_40] : memref<32x2xbf16, #tpu.memory_space<vmem>>, vector<32x2xbf16>
    %cst_41 = arith.constant dense<0.000000e+00> : vector<16x2xf32>
    %153 = tpu.matmul %151, %152, %cst_41 {dimension_numbers = #tpu.dot_dimension_numbers<[1], [0], [0], [1], [0, 0, 1, 1], [], []>} : vector<16x32xbf16>, vector<32x2xbf16>, vector<16x2xf32> -> vector<16x2xf32>
    %cst_42 = arith.constant 6.250000e-02 : f32
    %154 = vector.broadcast %cst_42 : f32 to vector<16x2xf32>
    %155 = arith.mulf %153, %154 : vector<16x2xf32>
    %c0_43 = arith.constant 0 : index
    %c0_44 = arith.constant 0 : index
    %156 = vector.load %arg11[%c0_43, %c0_44] : memref<4x16xbf16, #tpu.memory_space<vmem>>, vector<4x16xbf16>
    %157 = arith.truncf %155 : vector<16x2xf32> to vector<16x2xbf16>
    %cst_45 = arith.constant dense<0.000000e+00> : vector<4x2xf32>
    %158 = tpu.matmul %156, %157, %cst_45 {dimension_numbers = #tpu.dot_dimension_numbers<[1], [0], [0], [1], [0, 0, 1, 1], [], []>} : vector<4x16xbf16>, vector<16x2xbf16>, vector<4x2xf32> -> vector<4x2xf32>
    %159 = arith.negf %158 : vector<4x2xf32>
    %160 = math.exp %159 : vector<4x2xf32>
    %cst_46 = arith.constant 1.000000e+00 : f32
    %161 = vector.broadcast %cst_46 : f32 to vector<4x2xf32>
    %162 = arith.addf %161, %160 : vector<4x2xf32>
    %163 = arith.divf %161, %162 : vector<4x2xf32>
    %164 = arith.mulf %158, %163 : vector<4x2xf32>
    %c0_47 = arith.constant 0 : index
    %c0_48 = arith.constant 0 : index
    %165 = vector.load %arg12[%c0_47, %c0_48] : memref<16x4xbf16, #tpu.memory_space<vmem>>, vector<16x4xbf16>
    %166 = arith.truncf %164 : vector<4x2xf32> to vector<4x2xbf16>
    %cst_49 = arith.constant dense<0.000000e+00> : vector<16x2xf32>
    %167 = tpu.matmul %165, %166, %cst_49 {dimension_numbers = #tpu.dot_dimension_numbers<[1], [0], [0], [1], [0, 0, 1, 1], [], []>} : vector<16x4xbf16>, vector<4x2xbf16>, vector<16x2xf32> -> vector<16x2xf32>
    %168 = arith.negf %167 : vector<16x2xf32>
    %169 = math.exp %168 : vector<16x2xf32>
    %cst_50 = arith.constant 1.000000e+00 : f32
    %170 = vector.broadcast %cst_50 : f32 to vector<16x2xf32>
    %171 = arith.addf %170, %169 : vector<16x2xf32>
    %172 = arith.divf %170, %171 : vector<16x2xf32>
    %c0_51 = arith.constant 0 : index
    %c0_52 = arith.constant 0 : index
    %173 = vector.load %arg16[%c0_51, %c0_52] : memref<64x4xbf16, #tpu.memory_space<vmem>>, vector<64x4xbf16>
    %c0_53 = arith.constant 0 : index
    %c0_54 = arith.constant 0 : index
    %174 = vector.load %arg1[%c0_53, %c0_54] : memref<4x2xf32, #tpu.memory_space<vmem>>, vector<4x2xf32>
    %175 = arith.truncf %174 : vector<4x2xf32> to vector<4x2xbf16>
    %cst_55 = arith.constant dense<0.000000e+00> : vector<64x2xf32>
    %176 = tpu.matmul %173, %175, %cst_55 {dimension_numbers = #tpu.dot_dimension_numbers<[1], [0], [0], [1], [0, 0, 1, 1], [], []>} : vector<64x4xbf16>, vector<4x2xbf16>, vector<64x2xf32> -> vector<64x2xf32>
    %c0_56 = arith.constant 0 : index
    %c0_57 = arith.constant 0 : index
    %177 = vector.load %arg17[%c0_56, %c0_57] : memref<64x1xf32, #tpu.memory_space<vmem>>, vector<64x1xf32>
    %178 = vector.broadcast %177 : vector<64x1xf32> to vector<64x2xf32>
    %179 = arith.addf %176, %178 : vector<64x2xf32>
    %180 = arith.negf %179 : vector<64x2xf32>
    %181 = math.exp %180 : vector<64x2xf32>
    %cst_58 = arith.constant 1.000000e+00 : f32
    %182 = vector.broadcast %cst_58 : f32 to vector<64x2xf32>
    %183 = arith.addf %182, %181 : vector<64x2xf32>
    %184 = arith.divf %182, %183 : vector<64x2xf32>
    %185 = arith.mulf %179, %184 : vector<64x2xf32>
    %c0_59 = arith.constant 0 : index
    %c0_60 = arith.constant 0 : index
    %186 = vector.load %arg18[%c0_59, %c0_60] : memref<8x64xbf16, #tpu.memory_space<vmem>>, vector<8x64xbf16>
    %187 = arith.truncf %185 : vector<64x2xf32> to vector<64x2xbf16>
    %cst_61 = arith.constant dense<0.000000e+00> : vector<8x2xf32>
    %188 = tpu.matmul %186, %187, %cst_61 {dimension_numbers = #tpu.dot_dimension_numbers<[1], [0], [0], [1], [0, 0, 1, 1], [], []>} : vector<8x64xbf16>, vector<64x2xbf16>, vector<8x2xf32> -> vector<8x2xf32>
    %c0_62 = arith.constant 0 : index
    %c0_63 = arith.constant 0 : index
    %189 = vector.load %arg19[%c0_62, %c0_63] : memref<8x1xf32, #tpu.memory_space<vmem>>, vector<8x1xf32>
    %190 = vector.broadcast %189 : vector<8x1xf32> to vector<8x2xf32>
    %191 = arith.addf %188, %190 : vector<8x2xf32>
    %192 = tpu.concatenate %172, %191 in 0 : vector<16x2xf32>, vector<8x2xf32> -> vector<24x2xf32>
    %c0_64 = arith.constant 0 : index
    %c0_65 = arith.constant 0 : index
    %193 = vector.load %arg4[%c0_64, %c0_65] : memref<2x32xf32, #tpu.memory_space<vmem>>, vector<2x32xf32>
    %cst_66 = arith.constant dense<0.000000e+00> : vector<24x32xf32>
    %194 = tpu.matmul %192, %193, %cst_66 {dimension_numbers = #tpu.dot_dimension_numbers<[1], [0], [0], [1], [0, 0, 1, 1], [], []>} : vector<24x2xf32>, vector<2x32xf32>, vector<24x32xf32> -> vector<24x32xf32>
    %195 = vector.extract_strided_slice %194 {offsets = [0, 0], sizes = [16, 32], strides = [1, 1]} : vector<24x32xf32> to vector<16x32xf32>
    %196 = vector.extract_strided_slice %194 {offsets = [16, 0], sizes = [4, 32], strides = [1, 1]} : vector<24x32xf32> to vector<4x32xf32>
    %197 = vector.extract_strided_slice %194 {offsets = [20, 0], sizes = [4, 32], strides = [1, 1]} : vector<24x32xf32> to vector<4x32xf32>
    %c0_67 = arith.constant 0 : index
    %c0_68 = arith.constant 0 : index
    %198 = vector.load %arg13[%c0_67, %c0_68] : memref<4x16xbf16, #tpu.memory_space<vmem>>, vector<4x16xbf16>
    %199 = arith.mulf %150, %195 : vector<16x32xf32>
    %200 = arith.truncf %199 : vector<16x32xf32> to vector<16x32xbf16>
    %cst_69 = arith.constant dense<0.000000e+00> : vector<4x32xf32>
    %201 = tpu.matmul %198, %200, %cst_69 {dimension_numbers = #tpu.dot_dimension_numbers<[1], [0], [0], [1], [0, 0, 1, 1], [], []>} : vector<4x16xbf16>, vector<16x32xbf16>, vector<4x32xf32> -> vector<4x32xf32>
    %c0_70 = arith.constant 0 : index
    %c0_71 = arith.constant 0 : index
    %202 = vector.load %arg14[%c0_70, %c0_71] : memref<4x1xf32, #tpu.memory_space<vmem>>, vector<4x1xf32>
    %c0_72 = arith.constant 0 : index
    %c0_73 = arith.constant 0 : index
    %203 = vector.load %arg15[%c0_72, %c0_73] : memref<4x1xf32, #tpu.memory_space<vmem>>, vector<4x1xf32>
    %cst_74 = arith.constant dense<0.000000e+00> : vector<4xf32>
    %204 = vector.multi_reduction <add>, %201, %cst_74 [1] : vector<4x32xf32> to vector<4xf32>
    %205 = vector.shape_cast %204 : vector<4xf32> to vector<4x1xf32>
    %cst_75 = arith.constant 3.200000e+01 : f32
    %206 = vector.broadcast %cst_75 : f32 to vector<4x1xf32>
    %207 = arith.divf %205, %206 : vector<4x1xf32>
    %208 = arith.mulf %201, %201 : vector<4x32xf32>
    %cst_76 = arith.constant dense<0.000000e+00> : vector<4xf32>
    %209 = vector.multi_reduction <add>, %208, %cst_76 [1] : vector<4x32xf32> to vector<4xf32>
    %210 = vector.shape_cast %209 : vector<4xf32> to vector<4x1xf32>
    %cst_77 = arith.constant 3.200000e+01 : f32
    %211 = vector.broadcast %cst_77 : f32 to vector<4x1xf32>
    %212 = arith.divf %210, %211 : vector<4x1xf32>
    %213 = arith.mulf %207, %207 : vector<4x1xf32>
    %214 = arith.subf %212, %213 : vector<4x1xf32>
    %cst_78 = arith.constant 0.000000e+00 : f32
    %215 = vector.broadcast %cst_78 : f32 to vector<4x1xf32>
    %216 = arith.maximumf %214, %215 : vector<4x1xf32>
    %217 = vector.broadcast %207 : vector<4x1xf32> to vector<4x32xf32>
    %218 = arith.subf %201, %217 : vector<4x32xf32>
    %cst_79 = arith.constant 9.99999974E-6 : f32
    %219 = vector.broadcast %cst_79 : f32 to vector<4x1xf32>
    %220 = arith.addf %216, %219 : vector<4x1xf32>
    %221 = math.rsqrt %220 : vector<4x1xf32>
    %222 = vector.broadcast %221 : vector<4x1xf32> to vector<4x32xf32>
    %223 = arith.mulf %218, %222 : vector<4x32xf32>
    %224 = vector.broadcast %202 : vector<4x1xf32> to vector<4x32xf32>
    %225 = arith.mulf %223, %224 : vector<4x32xf32>
    %226 = vector.broadcast %203 : vector<4x1xf32> to vector<4x32xf32>
    %227 = arith.addf %225, %226 : vector<4x32xf32>
    %cst_80 = arith.constant 1.000000e+00 : f32
    %228 = vector.broadcast %cst_80 : f32 to vector<4x32xf32>
    %229 = arith.addf %196, %228 : vector<4x32xf32>
    %230 = arith.mulf %227, %229 : vector<4x32xf32>
    %231 = arith.addf %230, %197 : vector<4x32xf32>
    %232 = vector.extract_strided_slice %231 {offsets = [0, 0], sizes = [1, 16], strides = [1, 1]} : vector<4x32xf32> to vector<1x16xf32>
    %233 = vector.extract_strided_slice %231 {offsets = [1, 0], sizes = [1, 16], strides = [1, 1]} : vector<4x32xf32> to vector<1x16xf32>
    %234 = vector.extract_strided_slice %231 {offsets = [2, 0], sizes = [1, 16], strides = [1, 1]} : vector<4x32xf32> to vector<1x16xf32>
    %235 = vector.extract_strided_slice %231 {offsets = [3, 0], sizes = [1, 16], strides = [1, 1]} : vector<4x32xf32> to vector<1x16xf32>
    %236 = tpu.concatenate %232, %233, %234, %235 in 1 : vector<1x16xf32>, vector<1x16xf32>, vector<1x16xf32>, vector<1x16xf32> -> vector<1x64xf32>
    %237 = vector.extract_strided_slice %231 {offsets = [0, 16], sizes = [1, 16], strides = [1, 1]} : vector<4x32xf32> to vector<1x16xf32>
    %238 = vector.extract_strided_slice %231 {offsets = [1, 16], sizes = [1, 16], strides = [1, 1]} : vector<4x32xf32> to vector<1x16xf32>
    %239 = vector.extract_strided_slice %231 {offsets = [2, 16], sizes = [1, 16], strides = [1, 1]} : vector<4x32xf32> to vector<1x16xf32>
    %240 = vector.extract_strided_slice %231 {offsets = [3, 16], sizes = [1, 16], strides = [1, 1]} : vector<4x32xf32> to vector<1x16xf32>
    %241 = tpu.concatenate %237, %238, %239, %240 in 1 : vector<1x16xf32>, vector<1x16xf32>, vector<1x16xf32>, vector<1x16xf32> -> vector<1x64xf32>
    %242 = tpu.concatenate %236, %241 in 0 : vector<1x64xf32>, vector<1x64xf32> -> vector<2x64xf32>
    %243 = arith.truncf %242 : vector<2x64xf32> to vector<2x64xbf16>
    %c0_81 = arith.constant 0 : index
    %c0_82 = arith.constant 0 : index
    %244 = vector.load %arg20[%c0_81, %c0_82] : memref<64x8xbf16, #tpu.memory_space<vmem>>, vector<64x8xbf16>
    %cst_83 = arith.constant dense<0.000000e+00> : vector<2x8xf32>
    %245 = tpu.matmul %243, %244, %cst_83 {dimension_numbers = #tpu.dot_dimension_numbers<[1], [0], [0], [1], [0, 0, 1, 1], [], []>} : vector<2x64xbf16>, vector<64x8xbf16>, vector<2x8xf32> -> vector<2x8xf32>
    %c0_84 = arith.constant 0 : index
    %c0_85 = arith.constant 0 : index
    %246 = vector.load %arg21[%c0_84, %c0_85] : memref<1x8xf32, #tpu.memory_space<vmem>>, vector<1x8xf32>
    %247 = vector.broadcast %246 : vector<1x8xf32> to vector<2x8xf32>
    %248 = arith.addf %245, %247 : vector<2x8xf32>
    %c0_86 = arith.constant 0 : index
    %c0_87 = arith.constant 0 : index
    %249 = vector.load %arg22[%c0_86, %c0_87] : memref<2x8xf32, #tpu.memory_space<vmem>>, vector<2x8xf32>
    tpu.vector_store %arg22[%c0_86, %c0_87], %248 {strides = array<i32>} : memref<2x8xf32, #tpu.memory_space<vmem>>, vector<2x8xf32>,
    return
  }
}

</mosaic_0001>

<llo_original>
// kernel: film_efficientnet_b3.1
$region0: #{film_efficientnet_b3.1}
  #allocation0 [shape = 'u32[]', space=smem, size = 0x4, offset = 0x4, fixed_abs, tag = 'smem constant byte address 0x4 - core index']
  #allocation1 [shape = 'u32[144,128]{1,0:T(1,128)}', space=vmem, size = 0x12000, scoped, tag = 'internal scratch']
  %s0 = inlined_call_operand.vmem [shape: bf16[2,64,64], index: 0, kind: input, shape index: {}]
  %s1 = inlined_call_operand.vmem [shape: f32[4,2], index: 1, kind: input, shape index: {}]
  %s2 = inlined_call_operand.vmem [shape: bf16[576,16], index: 2, kind: input, shape index: {}]
  %s3 = inlined_call_operand.vmem [shape: bf16[32,2], index: 3, kind: input, shape index: {}]
  %s4 = inlined_call_operand.vmem [shape: f32[2,32], index: 4, kind: input, shape index: {}]
  %s5 = inlined_call_operand.vmem [shape: bf16[16,64], index: 5, kind: input, shape index: {}]
  %s6 = inlined_call_operand.vmem [shape: f32[16,1], index: 6, kind: input, shape index: {}]
  %s7 = inlined_call_operand.vmem [shape: f32[16,1], index: 7, kind: input, shape index: {}]
  %s8 = inlined_call_operand.vmem [shape: f32[16,9], index: 8, kind: input, shape index: {}]
  %s9 = inlined_call_operand.vmem [shape: f32[16,1], index: 9, kind: input, shape index: {}]
  %s10 = inlined_call_operand.vmem [shape: f32[16,1], index: 10, kind: input, shape index: {}]
  %s11 = inlined_call_operand.vmem [shape: bf16[4,16], index: 11, kind: input, shape index: {}]
  %s12 = inlined_call_operand.vmem [shape: bf16[16,4], index: 12, kind: input, shape index: {}]
  %s13 = inlined_call_operand.vmem [shape: bf16[4,16], index: 13, kind: input, shape index: {}]
  %s14 = inlined_call_operand.vmem [shape: f32[4,1], index: 14, kind: input, shape index: {}]
  %s15 = inlined_call_operand.vmem [shape: f32[4,1], index: 15, kind: input, shape index: {}]
  %s16 = inlined_call_operand.vmem [shape: bf16[64,4], index: 16, kind: input, shape index: {}]
  %s17 = inlined_call_operand.vmem [shape: f32[64,1], index: 17, kind: input, shape index: {}]
  %s18 = inlined_call_operand.vmem [shape: bf16[8,64], index: 18, kind: input, shape index: {}]
  %s19 = inlined_call_operand.vmem [shape: f32[8,1], index: 19, kind: input, shape index: {}]
  %s20 = inlined_call_operand.vmem [shape: bf16[64,8], index: 20, kind: input, shape index: {}]
  %s21 = inlined_call_operand.vmem [shape: f32[1,8], index: 21, kind: input, shape index: {}]
  %s22 = inlined_call_operand.hbm [shape: f32[2,8], index: 22, kind: output, shape index: {}]
  %s23 = sld [smem:[#allocation0]]
  $region98: #{film_efficientnet_b3.1} parent=0
    _
  %s25 = ssub.s32 1, %s23
  %s26 = scalar_select 0, %s25, %s23
  $region1: #{film_efficientnet_b3.1} parent=0
    #allocation2 [shape = 'u8[1024]{0}', space=vmem, size = 0x400, scoped, tag = 'output window, operand 0, single buffered']
    #allocation3 [shape = 's32[1]{0}', space=sflag, size = 0x4, scoped, tag = 'scoped memory for film_efficientnet_b3.1']
    %27 = vsyncpa [#allocation3], 0
    // Predicated region
    $region2: #{film_efficientnet_b3.1} parent=1 // pred_check
      _
    $region3: #{film_efficientnet_b3.1} parent=1 // pred_check_branch
      %29 = sbr.rel (0) target = $region5
    $region4: #{film_efficientnet_b3.1} parent=1 // pred_region
      _
    $region5: #{film_efficientnet_b3.1} parent=1 // pred_fallthru
      _
    // Predicated region
    $region6: #{film_efficientnet_b3.1} parent=1 // pred_check
      _
    $region7: #{film_efficientnet_b3.1} parent=1 // pred_check_branch
      %31 = sbr.rel (0) target = $region9
    $region8: #{film_efficientnet_b3.1} parent=1 // pred_region
      _
    $region9: #{film_efficientnet_b3.1} parent=1 // pred_fallthru
      _
    // Predicated region
    $region10: #{film_efficientnet_b3.1} parent=1 // pred_check
      _
    $region11: #{film_efficientnet_b3.1} parent=1 // pred_check_branch
      %33 = sbr.rel (0) target = $region13
    $region12: #{film_efficientnet_b3.1} parent=1 // pred_region
      _
    $region13: #{film_efficientnet_b3.1} parent=1 // pred_fallthru
      _
    // Predicated region
    $region14: #{film_efficientnet_b3.1} parent=1 // pred_check
      _
    $region15: #{film_efficientnet_b3.1} parent=1 // pred_check_branch
      %35 = sbr.rel (0) target = $region17
    $region16: #{film_efficientnet_b3.1} parent=1 // pred_region
      _
    $region17: #{film_efficientnet_b3.1} parent=1 // pred_fallthru
      _
    // Predicated region
    $region18: #{film_efficientnet_b3.1} parent=1 // pred_check
      _
    $region19: #{film_efficientnet_b3.1} parent=1 // pred_check_branch
      %37 = sbr.rel (0) target = $region21
    $region20: #{film_efficientnet_b3.1} parent=1 // pred_region
      _
    $region21: #{film_efficientnet_b3.1} parent=1 // pred_fallthru
      _
    // Predicated region
    $region22: #{film_efficientnet_b3.1} parent=1 // pred_check
      _
    $region23: #{film_efficientnet_b3.1} parent=1 // pred_check_branch
      %39 = sbr.rel (0) target = $region25
    $region24: #{film_efficientnet_b3.1} parent=1 // pred_region
      _
    $region25: #{film_efficientnet_b3.1} parent=1 // pred_fallthru
      _
    // Predicated region
    $region26: #{film_efficientnet_b3.1} parent=1 // pred_check
      _
    $region27: #{film_efficientnet_b3.1} parent=1 // pred_check_branch
      %41 = sbr.rel (0) target = $region29
    $region28: #{film_efficientnet_b3.1} parent=1 // pred_region
      _
    $region29: #{film_efficientnet_b3.1} parent=1 // pred_fallthru
      _
    // Predicated region
    $region30: #{film_efficientnet_b3.1} parent=1 // pred_check
      _
    $region31: #{film_efficientnet_b3.1} parent=1 // pred_check_branch
      %43 = sbr.rel (0) target = $region33
    $region32: #{film_efficientnet_b3.1} parent=1 // pred_region
      _
    $region33: #{film_efficientnet_b3.1} parent=1 // pred_fallthru
      _
    // Predicated region
    $region34: #{film_efficientnet_b3.1} parent=1 // pred_check
      _
    $region35: #{film_efficientnet_b3.1} parent=1 // pred_check_branch
      %45 = sbr.rel (0) target = $region37
    $region36: #{film_efficientnet_b3.1} parent=1 // pred_region
      _
    $region37: #{film_efficientnet_b3.1} parent=1 // pred_fallthru
      _
    // Predicated region
    $region38: #{film_efficientnet_b3.1} parent=1 // pred_check
      _
    $region39: #{film_efficientnet_b3.1} parent=1 // pred_check_branch
      %47 = sbr.rel (0) target = $region41
    $region40: #{film_efficientnet_b3.1} parent=1 // pred_region
      _
    $region41: #{film_efficientnet_b3.1} parent=1 // pred_fallthru
      _
    // Predicated region
    $region42: #{film_efficientnet_b3.1} parent=1 // pred_check
      _
    $region43: #{film_efficientnet_b3.1} parent=1 // pred_check_branch
      %49 = sbr.rel (0) target = $region45
    $region44: #{film_efficientnet_b3.1} parent=1 // pred_region
      _
    $region45: #{film_efficientnet_b3.1} parent=1 // pred_fallthru
      _
    // Predicated region
    $region46: #{film_efficientnet_b3.1} parent=1 // pred_check
      _
    $region47: #{film_efficientnet_b3.1} parent=1 // pred_check_branch
      %51 = sbr.rel (0) target = $region49
    $region48: #{film_efficientnet_b3.1} parent=1 // pred_region
      _
    $region49: #{film_efficientnet_b3.1} parent=1 // pred_fallthru
      _
    // Predicated region
    $region50: #{film_efficientnet_b3.1} parent=1 // pred_check
      _
    $region51: #{film_efficientnet_b3.1} parent=1 // pred_check_branch
      %53 = sbr.rel (0) target = $region53
    $region52: #{film_efficientnet_b3.1} parent=1 // pred_region
      _
    $region53: #{film_efficientnet_b3.1} parent=1 // pred_fallthru
      _
    // Predicated region
    $region54: #{film_efficientnet_b3.1} parent=1 // pred_check
      _
    $region55: #{film_efficientnet_b3.1} parent=1 // pred_check_branch
      %55 = sbr.rel (0) target = $region57
    $region56: #{film_efficientnet_b3.1} parent=1 // pred_region
      _
    $region57: #{film_efficientnet_b3.1} parent=1 // pred_fallthru
      _
    // Predicated region
    $region58: #{film_efficientnet_b3.1} parent=1 // pred_check
      _
    $region59: #{film_efficientnet_b3.1} parent=1 // pred_check_branch
      %57 = sbr.rel (0) target = $region61
    $region60: #{film_efficientnet_b3.1} parent=1 // pred_region
      _
    $region61: #{film_efficientnet_b3.1} parent=1 // pred_fallthru
      _
    // Predicated region
    $region62: #{film_efficientnet_b3.1} parent=1 // pred_check
      _
    $region63: #{film_efficientnet_b3.1} parent=1 // pred_check_branch
      %59 = sbr.rel (0) target = $region65
    $region64: #{film_efficientnet_b3.1} parent=1 // pred_region
      _
    $region65: #{film_efficientnet_b3.1} parent=1 // pred_fallthru
      _
    // Predicated region
    $region66: #{film_efficientnet_b3.1} parent=1 // pred_check
      _
    $region67: #{film_efficientnet_b3.1} parent=1 // pred_check_branch
      %61 = sbr.rel (0) target = $region69
    $region68: #{film_efficientnet_b3.1} parent=1 // pred_region
      _
    $region69: #{film_efficientnet_b3.1} parent=1 // pred_fallthru
      _
    // Predicated region
    $region70: #{film_efficientnet_b3.1} parent=1 // pred_check
      _
    $region71: #{film_efficientnet_b3.1} parent=1 // pred_check_branch
      %63 = sbr.rel (0) target = $region73
    $region72: #{film_efficientnet_b3.1} parent=1 // pred_region
      _
    $region73: #{film_efficientnet_b3.1} parent=1 // pred_fallthru
      _
    // Predicated region
    $region74: #{film_efficientnet_b3.1} parent=1 // pred_check
      _
    $region75: #{film_efficientnet_b3.1} parent=1 // pred_check_branch
      %65 = sbr.rel (0) target = $region77
    $region76: #{film_efficientnet_b3.1} parent=1 // pred_region
      _
    $region77: #{film_efficientnet_b3.1} parent=1 // pred_fallthru
      _
    // Predicated region
    $region78: #{film_efficientnet_b3.1} parent=1 // pred_check
      _
    $region79: #{film_efficientnet_b3.1} parent=1 // pred_check_branch
      %67 = sbr.rel (0) target = $region81
    $region80: #{film_efficientnet_b3.1} parent=1 // pred_region
      _
    $region81: #{film_efficientnet_b3.1} parent=1 // pred_fallthru
      _
    // Predicated region
    $region82: #{film_efficientnet_b3.1} parent=1 // pred_check
      _
    $region83: #{film_efficientnet_b3.1} parent=1 // pred_check_branch
      %69 = sbr.rel (0) target = $region85
    $region84: #{film_efficientnet_b3.1} parent=1 // pred_region
      _
    $region85: #{film_efficientnet_b3.1} parent=1 // pred_fallthru
      _
    // Predicated region
    $region86: #{film_efficientnet_b3.1} parent=1 // pred_check
      _
    $region87: #{film_efficientnet_b3.1} parent=1 // pred_check_branch
      %71 = sbr.rel (0) target = $region89
    $region88: #{film_efficientnet_b3.1} parent=1 // pred_region
      _
    $region89: #{film_efficientnet_b3.1} parent=1 // pred_fallthru
      _
    %v73 = vld [vmem:[%s0] sm:$0xf]
    %v74 = vld [vmem:[%s0 + $0x4] sm:$0xf]
    %v75 = vld [vmem:[%s0 + $0x8] sm:$0xf]
    %v76 = vld [vmem:[%s0 + $0xc] sm:$0xf]
    %v77 = vld [vmem:[%s0 + $0x10] sm:$0xf]
    %v78 = vld [vmem:[%s0 + $0x14] sm:$0xf]
    %v79 = vld [vmem:[%s0 + $0x18] sm:$0xf]
    %v80 = vld [vmem:[%s0 + $0x1c] sm:$0xf]
    %s81 = scalar_lea.vmem %s0, 32
    %v82 = vld [vmem:[%s81] sm:$0xf]
    %v83 = vld [vmem:[%s81 + $0x4] sm:$0xf]
    %v84 = vld [vmem:[%s81 + $0x8] sm:$0xf]
    %v85 = vld [vmem:[%s81 + $0xc] sm:$0xf]
    %v86 = vld [vmem:[%s81 + $0x10] sm:$0xf]
    %v87 = vld [vmem:[%s81 + $0x14] sm:$0xf]
    %v88 = vld [vmem:[%s81 + $0x18] sm:$0xf]
    %v89 = vld [vmem:[%s81 + $0x1c] sm:$0xf]
    %v98 = vunpack.c.l.b16 %v73
    %v99 = vunpack.c.l.b16 %v74
    %v100 = vunpack.c.l.b16 %v75
    %v101 = vunpack.c.l.b16 %v76
    %v102 = vunpack.c.l.b16 %v77
    %v103 = vunpack.c.l.b16 %v78
    %v104 = vunpack.c.l.b16 %v79
    %v105 = vunpack.c.l.b16 %v80
    %v106 = vpack.c.b16 %v99, %v98
    %v107 = vpack.c.b16 %v101, %v100
    %v108 = vpack.c.b16 %v103, %v102
    %v109 = vpack.c.b16 %v105, %v104
    %v118 = vunpack.c.l.b16 %v82
    %v119 = vunpack.c.l.b16 %v83
    %v120 = vunpack.c.l.b16 %v84
    %v121 = vunpack.c.l.b16 %v85
    %v122 = vunpack.c.l.b16 %v86
    %v123 = vunpack.c.l.b16 %v87
    %v124 = vunpack.c.l.b16 %v88
    %v125 = vunpack.c.l.b16 %v89
    %v126 = vpack.c.b16 %v119, %v118
    %v127 = vpack.c.b16 %v121, %v120
    %v128 = vpack.c.b16 %v123, %v122
    %v129 = vpack.c.b16 %v125, %v124
    %130 = vrot.lane.b32.xlu0 %v126, 64
    %v131 = vpop.permute.xlu0 %130
    %132 = vrot.lane.b32.xlu0 %v127, 64
    %v133 = vpop.permute.xlu0 %132
    %134 = vrot.lane.b32.xlu0 %v128, 64
    %v135 = vpop.permute.xlu0 %134
    %136 = vrot.lane.b32.xlu0 %v129, 64
    %v137 = vpop.permute.xlu0 %136
    %vm138 = vcmask 523264
    %v141 = vsel %vm138, %v106, %v131
    %v145 = vsel %vm138, %v107, %v133
    %v149 = vsel %vm138, %v108, %v135
    %v153 = vsel %vm138, %v109, %v137
    %v155 = vld [vmem:[%s5] sm:$0xf]
    %v156 = vld [vmem:[%s5 + $0x4] sm:$0xf]
    %v159 = vunpack.c.l.b16 %v155
    %v160 = vunpack.c.l.b16 %v156
    %v161 = vpack.c.b16 %v160, %v159
    %v163 = vsel %vm138, %v161, 0
    %165 = vmatprep.subr.bf16.mxu0 0
    %166 = vmatpush1.bf16.msra.mxu0 %v141
    %167 = vmatprep.subr.bf16.mxu0 0
    %168 = vmatpush1.bf16.msra.mxu0 %v145
    %169 = vmatprep.subr.bf16.mxu0 0
    %170 = vmatpush1.bf16.msra.mxu0 %v149
    %171 = vmatprep.subr.bf16.mxu0 0
    %172 = vmatpush1.bf16.msra.mxu0 %v153
    %173 = vmatprep.subr.bf16.mxu0 0
    %174 = vmatpush1.bf16.msra.mxu0 0
    %175 = vmatprep.subr.bf16.mxu0 0
    %176 = vmatpush1.bf16.msra.mxu0 0
    %177 = vmatprep.subr.bf16.mxu0 0
    %178 = vmatpush1.bf16.msra.mxu0 0
    %179 = vmatprep.subr.bf16.mxu0 0
    %180 = vmatpush1.bf16.msra.mxu0 0
    %181 = vmatprep.subr.bf16.mxu0 0
    %182 = vmatpush1.bf16.msra.mxu0 0
    %183 = vmatprep.subr.bf16.mxu0 0
    %184 = vmatpush1.bf16.msra.mxu0 0
    %185 = vmatprep.subr.bf16.mxu0 0
    %186 = vmatpush1.bf16.msra.mxu0 0
    %187 = vmatprep.subr.bf16.mxu0 0
    %188 = vmatpush1.bf16.msra.mxu0 0
    %189 = vmatprep.subr.bf16.mxu0 0
    %190 = vmatpush1.bf16.msra.mxu0 0
    %191 = vmatprep.subr.bf16.mxu0 0
    %192 = vmatpush1.bf16.msra.mxu0 0
    %193 = vmatprep.subr.bf16.mxu0 0
    %194 = vmatpush1.bf16.msra.mxu0 0
    %195 = vmatprep.subr.bf16.mxu0 0
    %196 = vmatpush1.bf16.msra.mxu0 0
    %197 = vmatprep.mubr.bf16.mxu0 0
    %198 = vmatmul.mubr.bf16.gmra.mrb[0].mxu0 %v163
    %v199 = vpop.f32.mrb[0].mxu0
    %v200 = vadd.f32 0.0, %v199
    %v201 = vpop.f32.mrb[0].mxu0
    %v202 = vpop.f32.mrb[0].mxu0
    %v203 = vadd.f32 0.0, %v202
    %v204 = vpop.f32.mrb[0].mxu0
    %205 = vdwg.mxu0
    %v206 = vld [vmem:[%s6] sm:$0xff]
    %v207 = vld [vmem:[%s6 + $0x8] sm:$0xff]
    %v208 = vld [vmem:[%s7] sm:$0xff]
    %v209 = vld [vmem:[%s7 + $0x8] sm:$0xff]
    %210 = vadd.xlane.f32.xlu0 %v200
    %v211 = vpop.xlane.xlu0 %210
    %212 = vadd.xlane.f32.xlu0 %v203
    %v213 = vpop.xlane.xlu0 %212
    %v214 = vrcp.pop 128.0
    %v215 = vmul.f32 %v211, %v214
    %v216 = vmul.f32 %v213, %v214
    %v217 = vmul.f32 %v200, %v200
    %v218 = vmul.f32 %v203, %v203
    %219 = vadd.xlane.f32.xlu0 %v217
    %v220 = vpop.xlane.xlu0 %219
    %221 = vadd.xlane.f32.xlu0 %v218
    %v222 = vpop.xlane.xlu0 %221
    %v223 = vmul.f32 %v220, %v214
    %v224 = vmul.f32 %v222, %v214
    %v225 = vmul.f32 %v215, %v215
    %v226 = vmul.f32 %v216, %v216
    %v227 = vsub.f32 %v223, %v225
    %v228 = vsub.f32 %v224, %v226
    %v229 = vmax.f32 %v227, 0.0
    %v230 = vmax.f32 %v228, 0.0
    %v231 = vsub.f32 %v200, %v215
    %v232 = vsub.f32 %v203, %v216
    %v233 = vadd.f32 %v229, 1e-05
    %v234 = vadd.f32 %v230, 1e-05
    %v235 = vrsqrt.pop %v233
    %v236 = vrsqrt.pop %v234
    %v237 = vmul.f32 %v231, %v235
    %v238 = vmul.f32 %v232, %v236
    %240 = vset.pattern.permute.xlu0 0
    %241 = vperm.xlu0 %240, %v206
    %v242 = vpop.permute.xlu0 %241
    %245 = vset.pattern.permute.xlu0 0
    %246 = vperm.xlu0 %245, %v207
    %v247 = vpop.permute.xlu0 %246
    %v249 = vmul.f32 %v237, %v242
    %v250 = vmul.f32 %v238, %v247
    %252 = vset.pattern.permute.xlu0 0
    %253 = vperm.xlu0 %252, %v208
    %v254 = vpop.permute.xlu0 %253
    %257 = vset.pattern.permute.xlu0 0
    %258 = vperm.xlu0 %257, %v209
    %v259 = vpop.permute.xlu0 %258
    %v261 = vadd.f32 %v249, %v254
    %v262 = vadd.f32 %v250, %v259
    %v263 = vmul.f32 %v261, %v261
    %v264 = vmul.f32 %v262, %v262
    %v265 = vmul.f32 %v261, %v263
    %v266 = vmul.f32 %v262, %v264
    %v267 = vmul.f32 %v265, 0.044715
    %v268 = vmul.f32 %v266, 0.044715
    %v269 = vadd.f32 %v261, %v267
    %v270 = vadd.f32 %v262, %v268
    %v271 = vmul.f32 %v269, 0.7978846
    %v272 = vmul.f32 %v270, 0.7978846
    %v273 = vtanh.pop %v271
    %v274 = vtanh.pop %v272
    %v275 = vadd.f32 %v273, 1.0
    %v276 = vadd.f32 %v274, 1.0
    %v277 = vmul.f32 %v275, 0.5
    %v278 = vmul.f32 %v276, 0.5
    %v279 = vmul.f32 %v261, %v277
    %v280 = vmul.f32 %v262, %v278
    %v281 = vld [vmem:[%s8] sm:$0xff]
    %v282 = vld [vmem:[%s8 + $0x8] sm:$0xff]
    %284 = vset.pattern.permute.xlu0 0
    %285 = vperm.xlu0 %284, %v281
    %v286 = vpop.permute.xlu0 %285
    %289 = vset.pattern.permute.xlu0 0
    %290 = vperm.xlu0 %289, %v282
    %v291 = vpop.permute.xlu0 %290
    %v293 = vmul.f32 %v279, %v286
    %v294 = vmul.f32 %v280, %v291
    %295 = vset.pattern.permute.xlu0 1
    %296 = vperm.xlu0 %295, %v281
    %v297 = vpop.permute.xlu0 %296
    %299 = vset.pattern.permute.xlu0 1
    %300 = vperm.xlu0 %299, %v282
    %v301 = vpop.permute.xlu0 %300
    %v303 = vmul.f32 %v279, %v297
    %v304 = vmul.f32 %v280, %v301
    %305 = vset.pattern.permute.xlu0 2
    %306 = vperm.xlu0 %305, %v281
    %v307 = vpop.permute.xlu0 %306
    %309 = vset.pattern.permute.xlu0 2
    %310 = vperm.xlu0 %309, %v282
    %v311 = vpop.permute.xlu0 %310
    %v313 = vmul.f32 %v279, %v307
    %v314 = vmul.f32 %v280, %v311
    %315 = vset.pattern.permute.xlu0 3
    %316 = vperm.xlu0 %315, %v281
    %v317 = vpop.permute.xlu0 %316
    %319 = vset.pattern.permute.xlu0 3
    %320 = vperm.xlu0 %319, %v282
    %v321 = vpop.permute.xlu0 %320
    %v323 = vmul.f32 %v279, %v317
    %v324 = vmul.f32 %v280, %v321
    %325 = vset.pattern.permute.xlu0 4
    %326 = vperm.xlu0 %325, %v281
    %v327 = vpop.permute.xlu0 %326
    %329 = vset.pattern.permute.xlu0 4
    %330 = vperm.xlu0 %329, %v282
    %v331 = vpop.permute.xlu0 %330
    %v333 = vmul.f32 %v279, %v327
    %v334 = vmul.f32 %v280, %v331
    %335 = vset.pattern.permute.xlu0 5
    %336 = vperm.xlu0 %335, %v281
    %v337 = vpop.permute.xlu0 %336
    %339 = vset.pattern.permute.xlu0 5
    %340 = vperm.xlu0 %339, %v282
    %v341 = vpop.permute.xlu0 %340
    %v343 = vmul.f32 %v279, %v337
    %v344 = vmul.f32 %v280, %v341
    %345 = vset.pattern.permute.xlu0 6
    %346 = vperm.xlu0 %345, %v281
    %v347 = vpop.permute.xlu0 %346
    %349 = vset.pattern.permute.xlu0 6
    %350 = vperm.xlu0 %349, %v282
    %v351 = vpop.permute.xlu0 %350
    %v353 = vmul.f32 %v279, %v347
    %v354 = vmul.f32 %v280, %v351
    %355 = vset.pattern.permute.xlu0 7
    %356 = vperm.xlu0 %355, %v281
    %v357 = vpop.permute.xlu0 %356
    %359 = vset.pattern.permute.xlu0 7
    %360 = vperm.xlu0 %359, %v282
    %v361 = vpop.permute.xlu0 %360
    %v363 = vmul.f32 %v279, %v357
    %v364 = vmul.f32 %v280, %v361
    %365 = vset.pattern.permute.xlu0 8
    %366 = vperm.xlu0 %365, %v281
    %v367 = vpop.permute.xlu0 %366
    %369 = vset.pattern.permute.xlu0 8
    %370 = vperm.xlu0 %369, %v282
    %v371 = vpop.permute.xlu0 %370
    %v373 = vmul.f32 %v279, %v367
    %v374 = vmul.f32 %v280, %v371
    %377 = vrot.lane.b32.xlu0 %v303, 64
    %v378 = vpop.permute.xlu0 %377
    %379 = vrot.lane.b32.xlu0 %v304, 64
    %v380 = vpop.permute.xlu0 %379
    %385 = vrot.lane.b32.xlu0 %v323, 64
    %v386 = vpop.permute.xlu0 %385
    %387 = vrot.lane.b32.xlu0 %v324, 64
    %v388 = vpop.permute.xlu0 %387
    %393 = vrot.lane.b32.xlu0 %v343, 64
    %v394 = vpop.permute.xlu0 %393
    %395 = vrot.lane.b32.xlu0 %v344, 64
    %v396 = vpop.permute.xlu0 %395
    %401 = vrot.lane.b32.xlu0 %v363, 64
    %v402 = vpop.permute.xlu0 %401
    %403 = vrot.lane.b32.xlu0 %v364, 64
    %v404 = vpop.permute.xlu0 %403
    %v407 = vsel %vm138, %v293, %v378
    %v408 = vsel %vm138, %v294, %v380
    %v409 = vsel %vm138, %v313, %v386
    %v410 = vsel %vm138, %v314, %v388
    %v411 = vsel %vm138, %v333, %v394
    %v412 = vsel %vm138, %v334, %v396
    %v413 = vsel %vm138, %v353, %v402
    %v414 = vsel %vm138, %v354, %v404
    %417 = vrot.lane.b32.xlu0 %v293, 64
    %v418 = vpop.permute.xlu0 %417
    %419 = vrot.lane.b32.xlu0 %v294, 64
    %v420 = vpop.permute.xlu0 %419
    %425 = vrot.lane.b32.xlu0 %v313, 64
    %v426 = vpop.permute.xlu0 %425
    %427 = vrot.lane.b32.xlu0 %v314, 64
    %v428 = vpop.permute.xlu0 %427
    %433 = vrot.lane.b32.xlu0 %v333, 64
    %v434 = vpop.permute.xlu0 %433
    %435 = vrot.lane.b32.xlu0 %v334, 64
    %v436 = vpop.permute.xlu0 %435
    %441 = vrot.lane.b32.xlu0 %v353, 64
    %v442 = vpop.permute.xlu0 %441
    %443 = vrot.lane.b32.xlu0 %v354, 64
    %v444 = vpop.permute.xlu0 %443
    %449 = vrot.lane.b32.xlu0 %v373, 64
    %v450 = vpop.permute.xlu0 %449
    %451 = vrot.lane.b32.xlu0 %v374, 64
    %v452 = vpop.permute.xlu0 %451
    %v455 = vsel %vm138, %v418, %v303
    %v456 = vsel %vm138, %v420, %v304
    %v457 = vsel %vm138, %v426, %v323
    %v458 = vsel %vm138, %v428, %v324
    %v459 = vsel %vm138, %v434, %v343
    %v460 = vsel %vm138, %v436, %v344
    %v461 = vsel %vm138, %v442, %v363
    %v462 = vsel %vm138, %v444, %v364
    %v463 = vpack.c.bf16 %v408, %v407
    %v464 = vpack.c.bf16 %v410, %v409
    %v465 = vpack.c.bf16 %v412, %v411
    %v466 = vpack.c.bf16 %v414, %v413
    %v467 = vpack.c.bf16 %v374, %v373
    %v468 = vpack.c.bf16 %v456, %v455
    %v469 = vpack.c.bf16 %v458, %v457
    %v470 = vpack.c.bf16 %v460, %v459
    %v471 = vpack.c.bf16 %v462, %v461
    %v472 = vpack.c.bf16 %v452, %v450
    %v473 = vld [vmem:[%s2] sm:$0xf]
    %v474 = vld [vmem:[%s2 + $0x4] sm:$0xf]
    %v475 = vld [vmem:[%s2 + $0x8] sm:$0xf]
    %v476 = vld [vmem:[%s2 + $0xc] sm:$0xf]
    %v477 = vld [vmem:[%s2 + $0x10] sm:$0xf]
    %v478 = vld [vmem:[%s2 + $0x14] sm:$0xf]
    %v479 = vld [vmem:[%s2 + $0x18] sm:$0xf]
    %v480 = vld [vmem:[%s2 + $0x1c] sm:$0xf]
    %v481 = vld [vmem:[%s2 + $0x20] sm:$0xf]
    %v482 = vld [vmem:[%s2 + $0x24] sm:$0xf]
    %v483 = vld [vmem:[%s2 + $0x28] sm:$0xf]
    %v484 = vld [vmem:[%s2 + $0x2c] sm:$0xf]
    %v485 = vld [vmem:[%s2 + $0x30] sm:$0xf]
    %v486 = vld [vmem:[%s2 + $0x34] sm:$0xf]
    %v487 = vld [vmem:[%s2 + $0x38] sm:$0xf]
    %v488 = vld [vmem:[%s2 + $0x3c] sm:$0xf]
    %v489 = vld [vmem:[%s2 + $0x40] sm:$0xf]
    %v490 = vld [vmem:[%s2 + $0x44] sm:$0xf]
    %v491 = vld [vmem:[%s2 + $0x48] sm:$0xf]
    %v492 = vld [vmem:[%s2 + $0x4c] sm:$0xf]
    %v493 = vld [vmem:[%s2 + $0x50] sm:$0xf]
    %v494 = vld [vmem:[%s2 + $0x54] sm:$0xf]
    %v495 = vld [vmem:[%s2 + $0x58] sm:$0xf]
    %v496 = vld [vmem:[%s2 + $0x5c] sm:$0xf]
    %v497 = vld [vmem:[%s2 + $0x60] sm:$0xf]
    %v498 = vld [vmem:[%s2 + $0x64] sm:$0xf]
    %v499 = vld [vmem:[%s2 + $0x68] sm:$0xf]
    %v500 = vld [vmem:[%s2 + $0x6c] sm:$0xf]
    %v501 = vld [vmem:[%s2 + $0x70] sm:$0xf]
    %v502 = vld [vmem:[%s2 + $0x74] sm:$0xf]
    %v503 = vld [vmem:[%s2 + $0x78] sm:$0xf]
    %v504 = vld [vmem:[%s2 + $0x7c] sm:$0xf]
    %v505 = vld [vmem:[%s2 + $0x80] sm:$0xf]
    %v506 = vld [vmem:[%s2 + $0x84] sm:$0xf]
    %v507 = vld [vmem:[%s2 + $0x88] sm:$0xf]
    %v508 = vld [vmem:[%s2 + $0x8c] sm:$0xf]
    %v509 = vld [vmem:[%s2 + $0x90] sm:$0xf]
    %v510 = vld [vmem:[%s2 + $0x94] sm:$0xf]
    %v511 = vld [vmem:[%s2 + $0x98] sm:$0xf]
    %v512 = vld [vmem:[%s2 + $0x9c] sm:$0xf]
    %v513 = vld [vmem:[%s2 + $0xa0] sm:$0xf]
    %v514 = vld [vmem:[%s2 + $0xa4] sm:$0xf]
    %v515 = vld [vmem:[%s2 + $0xa8] sm:$0xf]
    %v516 = vld [vmem:[%s2 + $0xac] sm:$0xf]
    %v517 = vld [vmem:[%s2 + $0xb0] sm:$0xf]
    %v518 = vld [vmem:[%s2 + $0xb4] sm:$0xf]
    %v519 = vld [vmem:[%s2 + $0xb8] sm:$0xf]
    %v520 = vld [vmem:[%s2 + $0xbc] sm:$0xf]
    %v521 = vld [vmem:[%s2 + $0xc0] sm:$0xf]
    %v522 = vld [vmem:[%s2 + $0xc4] sm:$0xf]
    %v523 = vld [vmem:[%s2 + $0xc8] sm:$0xf]
    %v524 = vld [vmem:[%s2 + $0xcc] sm:$0xf]
    %v525 = vld [vmem:[%s2 + $0xd0] sm:$0xf]
    %v526 = vld [vmem:[%s2 + $0xd4] sm:$0xf]
    %v527 = vld [vmem:[%s2 + $0xd8] sm:$0xf]
    %v528 = vld [vmem:[%s2 + $0xdc] sm:$0xf]
    %v529 = vld [vmem:[%s2 + $0xe0] sm:$0xf]
    %v530 = vld [vmem:[%s2 + $0xe4] sm:$0xf]
    %v531 = vld [vmem:[%s2 + $0xe8] sm:$0xf]
    %v532 = vld [vmem:[%s2 + $0xec] sm:$0xf]
    %v533 = vld [vmem:[%s2 + $0xf0] sm:$0xf]
    %v534 = vld [vmem:[%s2 + $0xf4] sm:$0xf]
    %v535 = vld [vmem:[%s2 + $0xf8] sm:$0xf]
    %v536 = vld [vmem:[%s2 + $0xfc] sm:$0xf]
    %v537 = vld [vmem:[%s2 + $0x100] sm:$0xf]
    %v538 = vld [vmem:[%s2 + $0x104] sm:$0xf]
    %v539 = vld [vmem:[%s2 + $0x108] sm:$0xf]
    %v540 = vld [vmem:[%s2 + $0x10c] sm:$0xf]
    %v541 = vld [vmem:[%s2 + $0x110] sm:$0xf]
    %v542 = vld [vmem:[%s2 + $0x114] sm:$0xf]
    %v543 = vld [vmem:[%s2 + $0x118] sm:$0xf]
    %v544 = vld [vmem:[%s2 + $0x11c] sm:$0xf]
    %v617 = vunpack.c.l.b16 %v473
    %v618 = vunpack.c.l.b16 %v474
    %v619 = vunpack.c.l.b16 %v475
    %v620 = vunpack.c.l.b16 %v476
    %v621 = vunpack.c.l.b16 %v477
    %v622 = vunpack.c.l.b16 %v478
    %v623 = vunpack.c.l.b16 %v479
    %v624 = vunpack.c.l.b16 %v480
    %v625 = vunpack.c.l.b16 %v481
    %v626 = vunpack.c.l.b16 %v482
    %v627 = vunpack.c.l.b16 %v483
    %v628 = vunpack.c.l.b16 %v484
    %v629 = vunpack.c.l.b16 %v485
    %v630 = vunpack.c.l.b16 %v486
    %v631 = vunpack.c.l.b16 %v487
    %v632 = vunpack.c.l.b16 %v488
    %v633 = vunpack.c.l.b16 %v489
    %v634 = vunpack.c.l.b16 %v490
    %v635 = vunpack.c.l.b16 %v491
    %v636 = vunpack.c.l.b16 %v492
    %v637 = vunpack.c.l.b16 %v493
    %v638 = vunpack.c.l.b16 %v494
    %v639 = vunpack.c.l.b16 %v495
    %v640 = vunpack.c.l.b16 %v496
    %v641 = vunpack.c.l.b16 %v497
    %v642 = vunpack.c.l.b16 %v498
    %v643 = vunpack.c.l.b16 %v499
    %v644 = vunpack.c.l.b16 %v500
    %v645 = vunpack.c.l.b16 %v501
    %v646 = vunpack.c.l.b16 %v502
    %v647 = vunpack.c.l.b16 %v503
    %v648 = vunpack.c.l.b16 %v504
    %v649 = vunpack.c.l.b16 %v505
    %v650 = vunpack.c.l.b16 %v506
    %v651 = vunpack.c.l.b16 %v507
    %v652 = vunpack.c.l.b16 %v508
    %v653 = vunpack.c.l.b16 %v509
    %v654 = vunpack.c.l.b16 %v510
    %v655 = vunpack.c.l.b16 %v511
    %v656 = vunpack.c.l.b16 %v512
    %v657 = vunpack.c.l.b16 %v513
    %v658 = vunpack.c.l.b16 %v514
    %v659 = vunpack.c.l.b16 %v515
    %v660 = vunpack.c.l.b16 %v516
    %v661 = vunpack.c.l.b16 %v517
    %v662 = vunpack.c.l.b16 %v518
    %v663 = vunpack.c.l.b16 %v519
    %v664 = vunpack.c.l.b16 %v520
    %v665 = vunpack.c.l.b16 %v521
    %v666 = vunpack.c.l.b16 %v522
    %v667 = vunpack.c.l.b16 %v523
    %v668 = vunpack.c.l.b16 %v524
    %v669 = vunpack.c.l.b16 %v525
    %v670 = vunpack.c.l.b16 %v526
    %v671 = vunpack.c.l.b16 %v527
    %v672 = vunpack.c.l.b16 %v528
    %v673 = vunpack.c.l.b16 %v529
    %v674 = vunpack.c.l.b16 %v530
    %v675 = vunpack.c.l.b16 %v531
    %v676 = vunpack.c.l.b16 %v532
    %v677 = vunpack.c.l.b16 %v533
    %v678 = vunpack.c.l.b16 %v534
    %v679 = vunpack.c.l.b16 %v535
    %v680 = vunpack.c.l.b16 %v536
    %v681 = vunpack.c.l.b16 %v537
    %v682 = vunpack.c.l.b16 %v538
    %v683 = vunpack.c.l.b16 %v539
    %v684 = vunpack.c.l.b16 %v540
    %v685 = vunpack.c.l.b16 %v541
    %v686 = vunpack.c.l.b16 %v542
    %v687 = vunpack.c.l.b16 %v543
    %v688 = vunpack.c.l.b16 %v544
    %v689 = vpack.c.b16 %v618, %v617
    %v690 = vpack.c.b16 %v620, %v619
    %v691 = vpack.c.b16 %v622, %v621
    %v692 = vpack.c.b16 %v624, %v623
    %v693 = vpack.c.b16 %v626, %v625
    %v694 = vpack.c.b16 %v628, %v627
    %v695 = vpack.c.b16 %v630, %v629
    %v696 = vpack.c.b16 %v632, %v631
    %v697 = vpack.c.b16 %v634, %v633
    %v698 = vpack.c.b16 %v636, %v635
    %v699 = vpack.c.b16 %v638, %v637
    %v700 = vpack.c.b16 %v640, %v639
    %v701 = vpack.c.b16 %v642, %v641
    %v702 = vpack.c.b16 %v644, %v643
    %v703 = vpack.c.b16 %v646, %v645
    %v704 = vpack.c.b16 %v648, %v647
    %v705 = vpack.c.b16 %v650, %v649
    %v706 = vpack.c.b16 %v652, %v651
    %v707 = vpack.c.b16 %v654, %v653
    %v708 = vpack.c.b16 %v656, %v655
    %v709 = vpack.c.b16 %v658, %v657
    %v710 = vpack.c.b16 %v660, %v659
    %v711 = vpack.c.b16 %v662, %v661
    %v712 = vpack.c.b16 %v664, %v663
    %v713 = vpack.c.b16 %v666, %v665
    %v714 = vpack.c.b16 %v668, %v667
    %v715 = vpack.c.b16 %v670, %v669
    %v716 = vpack.c.b16 %v672, %v671
    %v717 = vpack.c.b16 %v674, %v673
    %v718 = vpack.c.b16 %v676, %v675
    %v719 = vpack.c.b16 %v678, %v677
    %v720 = vpack.c.b16 %v680, %v679
    %v721 = vpack.c.b16 %v682, %v681
    %v722 = vpack.c.b16 %v684, %v683
    %v723 = vpack.c.b16 %v686, %v685
    %v724 = vpack.c.b16 %v688, %v687
    %v762 = vsel %vm138, %v467, 0
    %v765 = vsel %vm138, %v472, 0
    %767 = vmatprep.subr.bf16.mxu0 0
    %768 = vmatpush1.bf16.msra.mxu0 %v689
    %769 = vmatprep.subr.bf16.mxu0 0
    %770 = vmatpush1.bf16.msra.mxu0 %v690
    %771 = vmatprep.subr.bf16.mxu0 0
    %772 = vmatpush1.bf16.msra.mxu0 %v691
    %773 = vmatprep.subr.bf16.mxu0 0
    %774 = vmatpush1.bf16.msra.mxu0 %v692
    %775 = vmatprep.subr.bf16.mxu0 0
    %776 = vmatpush1.bf16.msra.mxu0 %v693
    %777 = vmatprep.subr.bf16.mxu0 0
    %778 = vmatpush1.bf16.msra.mxu0 %v694
    %779 = vmatprep.subr.bf16.mxu0 0
    %780 = vmatpush1.bf16.msra.mxu0 %v695
    %781 = vmatprep.subr.bf16.mxu0 0
    %782 = vmatpush1.bf16.msra.mxu0 %v696
    %783 = vmatprep.subr.bf16.mxu0 0
    %784 = vmatpush1.bf16.msra.mxu0 %v697
    %785 = vmatprep.subr.bf16.mxu0 0
    %786 = vmatpush1.bf16.msra.mxu0 %v698
    %787 = vmatprep.subr.bf16.mxu0 0
    %788 = vmatpush1.bf16.msra.mxu0 %v699
    %789 = vmatprep.subr.bf16.mxu0 0
    %790 = vmatpush1.bf16.msra.mxu0 %v700
    %791 = vmatprep.subr.bf16.mxu0 0
    %792 = vmatpush1.bf16.msra.mxu0 %v701
    %793 = vmatprep.subr.bf16.mxu0 0
    %794 = vmatpush1.bf16.msra.mxu0 %v702
    %795 = vmatprep.subr.bf16.mxu0 0
    %796 = vmatpush1.bf16.msra.mxu0 %v703
    %797 = vmatprep.subr.bf16.mxu0 0
    %798 = vmatpush1.bf16.msra.mxu0 %v704
    %799 = vmatprep.mubr.bf16.mxu0 %v464
    %800 = vmatmul.mubr.bf16.gmra.mrb[0].mxu0 %v463
    %v801 = vpop.f32.mrb[0].mxu0
    %v802 = vadd.f32 0.0, %v801
    %v803 = vpop.f32.mrb[0].mxu0
    %v804 = vpop.f32.mrb[0].mxu0
    %v805 = vadd.f32 0.0, %v804
    %v806 = vpop.f32.mrb[0].mxu0
    %807 = vmatprep.mubr.bf16.mxu0 %v469
    %808 = vmatmul.mubr.bf16.gmra.mrb[0].mxu0 %v468
    %v809 = vpop.f32.mrb[0].mxu0
    %v810 = vadd.f32 0.0, %v809
    %v811 = vpop.f32.mrb[0].mxu0
    %v812 = vpop.f32.mrb[0].mxu0
    %v813 = vadd.f32 0.0, %v812
    %v814 = vpop.f32.mrb[0].mxu0
    %815 = vdwg.mxu0
    %816 = vmatprep.subr.bf16.mxu0 0
    %817 = vmatpush1.bf16.msra.mxu0 %v705
    %818 = vmatprep.subr.bf16.mxu0 0
    %819 = vmatpush1.bf16.msra.mxu0 %v706
    %820 = vmatprep.subr.bf16.mxu0 0
    %821 = vmatpush1.bf16.msra.mxu0 %v707
    %822 = vmatprep.subr.bf16.mxu0 0
    %823 = vmatpush1.bf16.msra.mxu0 %v708
    %824 = vmatprep.subr.bf16.mxu0 0
    %825 = vmatpush1.bf16.msra.mxu0 %v709
    %826 = vmatprep.subr.bf16.mxu0 0
    %827 = vmatpush1.bf16.msra.mxu0 %v710
    %828 = vmatprep.subr.bf16.mxu0 0
    %829 = vmatpush1.bf16.msra.mxu0 %v711
    %830 = vmatprep.subr.bf16.mxu0 0
    %831 = vmatpush1.bf16.msra.mxu0 %v712
    %832 = vmatprep.subr.bf16.mxu0 0
    %833 = vmatpush1.bf16.msra.mxu0 %v713
    %834 = vmatprep.subr.bf16.mxu0 0
    %835 = vmatpush1.bf16.msra.mxu0 %v714
    %836 = vmatprep.subr.bf16.mxu0 0
    %837 = vmatpush1.bf16.msra.mxu0 %v715
    %838 = vmatprep.subr.bf16.mxu0 0
    %839 = vmatpush1.bf16.msra.mxu0 %v716
    %840 = vmatprep.subr.bf16.mxu0 0
    %841 = vmatpush1.bf16.msra.mxu0 %v717
    %842 = vmatprep.subr.bf16.mxu0 0
    %843 = vmatpush1.bf16.msra.mxu0 %v718
    %844 = vmatprep.subr.bf16.mxu0 0
    %845 = vmatpush1.bf16.msra.mxu0 %v719
    %846 = vmatprep.subr.bf16.mxu0 0
    %847 = vmatpush1.bf16.msra.mxu0 %v720
    %848 = vmatprep.mubr.bf16.mxu0 %v466
    %849 = vmatmul.mubr.bf16.gmra.mrb[0].mxu0 %v465
    %v850 = vpop.f32.mrb[0].mxu0
    %v851 = vadd.f32 %v802, %v850
    %v852 = vpop.f32.mrb[0].mxu0
    %v853 = vpop.f32.mrb[0].mxu0
    %v854 = vadd.f32 %v805, %v853
    %v855 = vpop.f32.mrb[0].mxu0
    %856 = vmatprep.mubr.bf16.mxu0 %v471
    %857 = vmatmul.mubr.bf16.gmra.mrb[0].mxu0 %v470
    %v858 = vpop.f32.mrb[0].mxu0
    %v859 = vadd.f32 %v810, %v858
    %v860 = vpop.f32.mrb[0].mxu0
    %v861 = vpop.f32.mrb[0].mxu0
    %v862 = vadd.f32 %v813, %v861
    %v863 = vpop.f32.mrb[0].mxu0
    %864 = vdwg.mxu0
    %865 = vmatprep.subr.bf16.mxu0 0
    %866 = vmatpush1.bf16.msra.mxu0 %v721
    %867 = vmatprep.subr.bf16.mxu0 0
    %868 = vmatpush1.bf16.msra.mxu0 %v722
    %869 = vmatprep.subr.bf16.mxu0 0
    %870 = vmatpush1.bf16.msra.mxu0 %v723
    %871 = vmatprep.subr.bf16.mxu0 0
    %872 = vmatpush1.bf16.msra.mxu0 %v724
    %873 = vmatprep.subr.bf16.mxu0 0
    %874 = vmatpush1.bf16.msra.mxu0 0
    %875 = vmatprep.subr.bf16.mxu0 0
    %876 = vmatpush1.bf16.msra.mxu0 0
    %877 = vmatprep.subr.bf16.mxu0 0
    %878 = vmatpush1.bf16.msra.mxu0 0
    %879 = vmatprep.subr.bf16.mxu0 0
    %880 = vmatpush1.bf16.msra.mxu0 0
    %881 = vmatprep.subr.bf16.mxu0 0
    %882 = vmatpush1.bf16.msra.mxu0 0
    %883 = vmatprep.subr.bf16.mxu0 0
    %884 = vmatpush1.bf16.msra.mxu0 0
    %885 = vmatprep.subr.bf16.mxu0 0
    %886 = vmatpush1.bf16.msra.mxu0 0
    %887 = vmatprep.subr.bf16.mxu0 0
    %888 = vmatpush1.bf16.msra.mxu0 0
    %889 = vmatprep.subr.bf16.mxu0 0
    %890 = vmatpush1.bf16.msra.mxu0 0
    %891 = vmatprep.subr.bf16.mxu0 0
    %892 = vmatpush1.bf16.msra.mxu0 0
    %893 = vmatprep.subr.bf16.mxu0 0
    %894 = vmatpush1.bf16.msra.mxu0 0
    %895 = vmatprep.subr.bf16.mxu0 0
    %896 = vmatpush1.bf16.msra.mxu0 0
    %897 = vmatprep.mubr.bf16.mxu0 0
    %898 = vmatmul.mubr.bf16.gmra.mrb[0].mxu0 %v762
    %v899 = vpop.f32.mrb[0].mxu0
    %v900 = vadd.f32 %v851, %v899
    %v901 = vpop.f32.mrb[0].mxu0
    %v902 = vpop.f32.mrb[0].mxu0
    %v903 = vadd.f32 %v854, %v902
    %v904 = vpop.f32.mrb[0].mxu0
    %905 = vmatprep.mubr.bf16.mxu0 0
    %906 = vmatmul.mubr.bf16.gmra.mrb[0].mxu0 %v765
    %v907 = vpop.f32.mrb[0].mxu0
    %v908 = vadd.f32 %v859, %v907
    %v909 = vpop.f32.mrb[0].mxu0
    %v910 = vpop.f32.mrb[0].mxu0
    %v911 = vadd.f32 %v862, %v910
    %v912 = vpop.f32.mrb[0].mxu0
    %913 = vdwg.mxu0
    %916 = vrot.lane.b32.xlu0 %v908, 16
    %v917 = vpop.permute.xlu0 %916
    %918 = vrot.lane.b32.xlu0 %v911, 16
    %v919 = vpop.permute.xlu0 %918
    %vm922 = vcmask 130048
    %v923 = vsel %vm922, %v900, %v917
    %v924 = vsel %vm922, %v903, %v919
    %v925 = vld [vmem:[%s9] sm:$0xff]
    %v926 = vld [vmem:[%s9 + $0x8] sm:$0xff]
    %v927 = vld [vmem:[%s10] sm:$0xff]
    %v928 = vld [vmem:[%s10 + $0x8] sm:$0xff]
    %vm929 = vcmask 261120
    %v930 = vsel %vm929, %v923, 0.0
    %931 = vadd.xlane.f32.xlu0 %v930
    %v932 = vpop.xlane.xlu0 %931
    %v933 = vsel %vm929, %v924, 0.0
    %934 = vadd.xlane.f32.xlu0 %v933
    %v935 = vpop.xlane.xlu0 %934
    %v936 = vrcp.pop 32.0
    %v937 = vmul.f32 %v932, %v936
    %v938 = vmul.f32 %v935, %v936
    %v939 = vmul.f32 %v923, %v923
    %v940 = vmul.f32 %v924, %v924
    %v941 = vsel %vm929, %v939, 0.0
    %942 = vadd.xlane.f32.xlu0 %v941
    %v943 = vpop.xlane.xlu0 %942
    %v944 = vsel %vm929, %v940, 0.0
    %945 = vadd.xlane.f32.xlu0 %v944
    %v946 = vpop.xlane.xlu0 %945
    %v947 = vmul.f32 %v943, %v936
    %v948 = vmul.f32 %v946, %v936
    %v949 = vmul.f32 %v937, %v937
    %v950 = vmul.f32 %v938, %v938
    %v951 = vsub.f32 %v947, %v949
    %v952 = vsub.f32 %v948, %v950
    %v953 = vmax.f32 %v951, 0.0
    %v954 = vmax.f32 %v952, 0.0
    %v955 = vsub.f32 %v923, %v937
    %v956 = vsub.f32 %v924, %v938
    %v957 = vadd.f32 %v953, 1e-05
    %v958 = vadd.f32 %v954, 1e-05
    %v959 = vrsqrt.pop %v957
    %v960 = vrsqrt.pop %v958
    %v961 = vmul.f32 %v955, %v959
    %v962 = vmul.f32 %v956, %v960
    %964 = vset.pattern.permute.xlu0 0
    %965 = vperm.xlu0 %964, %v925
    %v966 = vpop.permute.xlu0 %965
    %969 = vset.pattern.permute.xlu0 0
    %970 = vperm.xlu0 %969, %v926
    %v971 = vpop.permute.xlu0 %970
    %v973 = vmul.f32 %v961, %v966
    %v974 = vmul.f32 %v962, %v971
    %976 = vset.pattern.permute.xlu0 0
    %977 = vperm.xlu0 %976, %v927
    %v978 = vpop.permute.xlu0 %977
    %981 = vset.pattern.permute.xlu0 0
    %982 = vperm.xlu0 %981, %v928
    %v983 = vpop.permute.xlu0 %982
    %v985 = vadd.f32 %v973, %v978
    %v986 = vadd.f32 %v974, %v983
    %v987 = vmul.f32 %v985, %v985
    %v988 = vmul.f32 %v986, %v986
    %v989 = vmul.f32 %v985, %v987
    %v990 = vmul.f32 %v986, %v988
    %v991 = vmul.f32 %v989, 0.044715
    %v992 = vmul.f32 %v990, 0.044715
    %v993 = vadd.f32 %v985, %v991
    %v994 = vadd.f32 %v986, %v992
    %v995 = vmul.f32 %v993, 0.7978846
    %v996 = vmul.f32 %v994, 0.7978846
    %v997 = vtanh.pop %v995
    %v998 = vtanh.pop %v996
    %v999 = vadd.f32 %v997, 1.0
    %v1000 = vadd.f32 %v998, 1.0
    %v1001 = vmul.f32 %v999, 0.5
    %v1002 = vmul.f32 %v1000, 0.5
    %v1003 = vmul.f32 %v985, %v1001
    %v1004 = vmul.f32 %v986, %v1002
    %v1005 = vpack.c.bf16 %v1004, %v1003
    %v1006 = vld [vmem:[%s3] sm:$0xf]
    %v1007 = vld [vmem:[%s3 + $0x4] sm:$0xf]
    %v1008 = vld [vmem:[%s3 + $0x8] sm:$0xf]
    %v1009 = vld [vmem:[%s3 + $0xc] sm:$0xf]
    %v1014 = vunpack.c.l.b16 %v1006
    %v1015 = vunpack.c.l.b16 %v1007
    %v1016 = vunpack.c.l.b16 %v1008
    %v1017 = vunpack.c.l.b16 %v1009
    %v1018 = vpack.c.b16 %v1015, %v1014
    %v1019 = vpack.c.b16 %v1017, %v1016
    %v1023 = vsel %vm929, %v1005, 0
    %1025 = vmatprep.subr.bf16.mxu0 0
    %1026 = vmatpush1.bf16.msra.mxu0 %v1018
    %1027 = vmatprep.subr.bf16.mxu0 0
    %1028 = vmatpush1.bf16.msra.mxu0 %v1019
    %1029 = vmatprep.subr.bf16.mxu0 0
    %1030 = vmatpush1.bf16.msra.mxu0 0
    %1031 = vmatprep.subr.bf16.mxu0 0
    %1032 = vmatpush1.bf16.msra.mxu0 0
    %1033 = vmatprep.subr.bf16.mxu0 0
    %1034 = vmatpush1.bf16.msra.mxu0 0
    %1035 = vmatprep.subr.bf16.mxu0 0
    %1036 = vmatpush1.bf16.msra.mxu0 0
    %1037 = vmatprep.subr.bf16.mxu0 0
    %1038 = vmatpush1.bf16.msra.mxu0 0
    %1039 = vmatprep.subr.bf16.mxu0 0
    %1040 = vmatpush1.bf16.msra.mxu0 0
    %1041 = vmatprep.subr.bf16.mxu0 0
    %1042 = vmatpush1.bf16.msra.mxu0 0
    %1043 = vmatprep.subr.bf16.mxu0 0
    %1044 = vmatpush1.bf16.msra.mxu0 0
    %1045 = vmatprep.subr.bf16.mxu0 0
    %1046 = vmatpush1.bf16.msra.mxu0 0
    %1047 = vmatprep.subr.bf16.mxu0 0
    %1048 = vmatpush1.bf16.msra.mxu0 0
    %1049 = vmatprep.subr.bf16.mxu0 0
    %1050 = vmatpush1.bf16.msra.mxu0 0
    %1051 = vmatprep.subr.bf16.mxu0 0
    %1052 = vmatpush1.bf16.msra.mxu0 0
    %1053 = vmatprep.subr.bf16.mxu0 0
    %1054 = vmatpush1.bf16.msra.mxu0 0
    %1055 = vmatprep.subr.bf16.mxu0 0
    %1056 = vmatpush1.bf16.msra.mxu0 0
    %1057 = vmatprep.mubr.bf16.mxu0 0
    %1058 = vmatmul.mubr.bf16.gmra.mrb[0].mxu0 %v1023
    %v1059 = vpop.f32.mrb[0].mxu0
    %v1060 = vadd.f32 0.0, %v1059
    %v1061 = vpop.f32.mrb[0].mxu0
    %v1062 = vpop.f32.mrb[0].mxu0
    %v1063 = vadd.f32 0.0, %v1062
    %v1064 = vpop.f32.mrb[0].mxu0
    %1065 = vdwg.mxu0
    %v1066 = vmul.f32 %v1060, 0.0625
    %v1067 = vmul.f32 %v1063, 0.0625
    %v1068 = vld [vmem:[%s11] sm:$0x3]
    %v1069 = vpack.c.bf16 %v1067, %v1066
    %v1071 = vsel %vm922, %v1068, 0
    %1073 = vmatprep.subr.bf16.mxu0 0
    %1074 = vmatpush1.bf16.msra.mxu0 %v1069
    %1075 = vmatprep.subr.bf16.mxu0 0
    %1076 = vmatpush1.bf16.msra.mxu0 0
    %1077 = vmatprep.subr.bf16.mxu0 0
    %1078 = vmatpush1.bf16.msra.mxu0 0
    %1079 = vmatprep.subr.bf16.mxu0 0
    %1080 = vmatpush1.bf16.msra.mxu0 0
    %1081 = vmatprep.subr.bf16.mxu0 0
    %1082 = vmatpush1.bf16.msra.mxu0 0
    %1083 = vmatprep.subr.bf16.mxu0 0
    %1084 = vmatpush1.bf16.msra.mxu0 0
    %1085 = vmatprep.subr.bf16.mxu0 0
    %1086 = vmatpush1.bf16.msra.mxu0 0
    %1087 = vmatprep.subr.bf16.mxu0 0
    %1088 = vmatpush1.bf16.msra.mxu0 0
    %1089 = vmatprep.subr.bf16.mxu0 0
    %1090 = vmatpush1.bf16.msra.mxu0 0
    %1091 = vmatprep.subr.bf16.mxu0 0
    %1092 = vmatpush1.bf16.msra.mxu0 0
    %1093 = vmatprep.subr.bf16.mxu0 0
    %1094 = vmatpush1.bf16.msra.mxu0 0
    %1095 = vmatprep.subr.bf16.mxu0 0
    %1096 = vmatpush1.bf16.msra.mxu0 0
    %1097 = vmatprep.subr.bf16.mxu0 0
    %1098 = vmatpush1.bf16.msra.mxu0 0
    %1099 = vmatprep.subr.bf16.mxu0 0
    %1100 = vmatpush1.bf16.msra.mxu0 0
    %1101 = vmatprep.subr.bf16.mxu0 0
    %1102 = vmatpush1.bf16.msra.mxu0 0
    %1103 = vmatprep.subr.bf16.mxu0 0
    %1104 = vmatpush1.bf16.msra.mxu0 0
    %1105 = vmatprep.mubr.bf16.mxu0 0
    %1106 = vmatmul.mubr.bf16.gmra.mrb[0].mxu0 %v1071
    %v1107 = vpop.f32.mrb[0].mxu0
    %v1108 = vadd.f32 0.0, %v1107
    %v1109 = vpop.f32.mrb[0].mxu0
    %v1110 = vpop.f32.mrb[0].mxu0
    %v1111 = vpop.f32.mrb[0].mxu0
    %1112 = vdwg.mxu0
    %v1113 = vxor.u32 %v1108, 2147483648
    %v1114 = vmul.f32 %v1113, 1.442695
    %v1115 = vpow.pop %v1114
    %v1116 = vadd.f32 %v1115, 1.0
    %v1117 = vrcp.pop %v1116
    %v1118 = vmul.f32 1.0, %v1117
    %v1119 = vmul.f32 %v1108, %v1118
    %v1120 = vld [vmem:[%s12] sm:$0xf]
    %v1121 = vld [vmem:[%s12 + $0x4] sm:$0xf]
    %v1122 = vpack.c.bf16 %v1119, %v1119
    %v1125 = vunpack.c.l.b16 %v1120
    %v1126 = vunpack.c.l.b16 %v1121
    %v1127 = vpack.c.b16 %v1126, %v1125
    %vm1128 = vcmask 31744
    %v1130 = vsel %vm1128, %v1127, 0
    %vm1132 = vcmask 1041408
    %v1134 = vsel %vm1132, %v1122, 0
    %1136 = vmatprep.subr.bf16.mxu0 0
    %1137 = vmatpush1.bf16.msra.mxu0 %v1134
    %1138 = vmatprep.subr.bf16.mxu0 0
    %1139 = vmatpush1.bf16.msra.mxu0 0
    %1140 = vmatprep.subr.bf16.mxu0 0
    %1141 = vmatpush1.bf16.msra.mxu0 0
    %1142 = vmatprep.subr.bf16.mxu0 0
    %1143 = vmatpush1.bf16.msra.mxu0 0
    %1144 = vmatprep.subr.bf16.mxu0 0
    %1145 = vmatpush1.bf16.msra.mxu0 0
    %1146 = vmatprep.subr.bf16.mxu0 0
    %1147 = vmatpush1.bf16.msra.mxu0 0
    %1148 = vmatprep.subr.bf16.mxu0 0
    %1149 = vmatpush1.bf16.msra.mxu0 0
    %1150 = vmatprep.subr.bf16.mxu0 0
    %1151 = vmatpush1.bf16.msra.mxu0 0
    %1152 = vmatprep.subr.bf16.mxu0 0
    %1153 = vmatpush1.bf16.msra.mxu0 0
    %1154 = vmatprep.subr.bf16.mxu0 0
    %1155 = vmatpush1.bf16.msra.mxu0 0
    %1156 = vmatprep.subr.bf16.mxu0 0
    %1157 = vmatpush1.bf16.msra.mxu0 0
    %1158 = vmatprep.subr.bf16.mxu0 0
    %1159 = vmatpush1.bf16.msra.mxu0 0
    %1160 = vmatprep.subr.bf16.mxu0 0
    %1161 = vmatpush1.bf16.msra.mxu0 0
    %1162 = vmatprep.subr.bf16.mxu0 0
    %1163 = vmatpush1.bf16.msra.mxu0 0
    %1164 = vmatprep.subr.bf16.mxu0 0
    %1165 = vmatpush1.bf16.msra.mxu0 0
    %1166 = vmatprep.subr.bf16.mxu0 0
    %1167 = vmatpush1.bf16.msra.mxu0 0
    %1168 = vmatprep.mubr.bf16.mxu0 0
    %1169 = vmatmul.mubr.bf16.gmra.mrb[0].mxu0 %v1130
    %v1170 = vpop.f32.mrb[0].mxu0
    %v1171 = vadd.f32 0.0, %v1170
    %v1172 = vpop.f32.mrb[0].mxu0
    %v1173 = vpop.f32.mrb[0].mxu0
    %v1174 = vadd.f32 0.0, %v1173
    %v1175 = vpop.f32.mrb[0].mxu0
    %1176 = vdwg.mxu0
    %v1177 = vxor.u32 %v1171, 2147483648
    %v1178 = vxor.u32 %v1174, 2147483648
    %v1179 = vmul.f32 %v1177, 1.442695
    %v1180 = vpow.pop %v1179
    %v1181 = vmul.f32 %v1178, 1.442695
    %v1182 = vpow.pop %v1181
    %v1183 = vadd.f32 %v1180, 1.0
    %v1184 = vadd.f32 %v1182, 1.0
    %v1185 = vrcp.pop %v1183
    %v1186 = vmul.f32 1.0, %v1185
    %v1187 = vrcp.pop %v1184
    %v1188 = vmul.f32 1.0, %v1187
    %v1189 = vld [vmem:[%s16] sm:$0xf]
    %v1190 = vld [vmem:[%s16 + $0x4] sm:$0xf]
    %v1191 = vld [vmem:[%s16 + $0x8] sm:$0xf]
    %v1192 = vld [vmem:[%s16 + $0xc] sm:$0xf]
    %v1193 = vld [vmem:[%s16 + $0x10] sm:$0xf]
    %v1194 = vld [vmem:[%s16 + $0x14] sm:$0xf]
    %v1195 = vld [vmem:[%s16 + $0x18] sm:$0xf]
    %v1196 = vld [vmem:[%s16 + $0x1c] sm:$0xf]
    %v1197 = vld [vmem:[%s1] sm:$0xf]
    %v1198 = vpack.c.bf16 %v1197, %v1197
    %v1199 = vld [vmem:[%s17] sm:$0xff]
    %v1200 = vld [vmem:[%s17 + $0x8] sm:$0xff]
    %v1201 = vld [vmem:[%s17 + $0x10] sm:$0xff]
    %v1202 = vld [vmem:[%s17 + $0x18] sm:$0xff]
    %v1203 = vld [vmem:[%s17 + $0x20] sm:$0xff]
    %v1204 = vld [vmem:[%s17 + $0x28] sm:$0xff]
    %v1205 = vld [vmem:[%s17 + $0x30] sm:$0xff]
    %v1206 = vld [vmem:[%s17 + $0x38] sm:$0xff]
    %1208 = vset.pattern.permute.xlu0 0
    %1209 = vperm.xlu0 %1208, %v1199
    %v1210 = vpop.permute.xlu0 %1209
    %1213 = vset.pattern.permute.xlu0 0
    %1214 = vperm.xlu0 %1213, %v1200
    %v1215 = vpop.permute.xlu0 %1214
    %1218 = vset.pattern.permute.xlu0 0
    %1219 = vperm.xlu0 %1218, %v1201
    %v1220 = vpop.permute.xlu0 %1219
    %1223 = vset.pattern.permute.xlu0 0
    %1224 = vperm.xlu0 %1223, %v1202
    %v1225 = vpop.permute.xlu0 %1224
    %1228 = vset.pattern.permute.xlu0 0
    %1229 = vperm.xlu0 %1228, %v1203
    %v1230 = vpop.permute.xlu0 %1229
    %1233 = vset.pattern.permute.xlu0 0
    %1234 = vperm.xlu0 %1233, %v1204
    %v1235 = vpop.permute.xlu0 %1234
    %1238 = vset.pattern.permute.xlu0 0
    %1239 = vperm.xlu0 %1238, %v1205
    %v1240 = vpop.permute.xlu0 %1239
    %1243 = vset.pattern.permute.xlu0 0
    %1244 = vperm.xlu0 %1243, %v1206
    %v1245 = vpop.permute.xlu0 %1244
    %v1255 = vunpack.c.l.b16 %v1189
    %v1256 = vunpack.c.l.b16 %v1190
    %v1257 = vunpack.c.l.b16 %v1191
    %v1258 = vunpack.c.l.b16 %v1192
    %v1259 = vunpack.c.l.b16 %v1193
    %v1260 = vunpack.c.l.b16 %v1194
    %v1261 = vunpack.c.l.b16 %v1195
    %v1262 = vunpack.c.l.b16 %v1196
    %v1263 = vpack.c.b16 %v1256, %v1255
    %v1264 = vpack.c.b16 %v1258, %v1257
    %v1265 = vpack.c.b16 %v1260, %v1259
    %v1266 = vpack.c.b16 %v1262, %v1261
    %v1268 = vsel %vm1128, %v1263, 0
    %v1271 = vsel %vm1128, %v1264, 0
    %v1274 = vsel %vm1128, %v1265, 0
    %v1277 = vsel %vm1128, %v1266, 0
    %v1280 = vsel %vm1132, %v1198, 0
    %1282 = vmatprep.subr.bf16.mxu0 0
    %1283 = vmatpush1.bf16.msra.mxu0 %v1280
    %1284 = vmatprep.subr.bf16.mxu0 0
    %1285 = vmatpush1.bf16.msra.mxu0 0
    %1286 = vmatprep.subr.bf16.mxu0 0
    %1287 = vmatpush1.bf16.msra.mxu0 0
    %1288 = vmatprep.subr.bf16.mxu0 0
    %1289 = vmatpush1.bf16.msra.mxu0 0
    %1290 = vmatprep.subr.bf16.mxu0 0
    %1291 = vmatpush1.bf16.msra.mxu0 0
    %1292 = vmatprep.subr.bf16.mxu0 0
    %1293 = vmatpush1.bf16.msra.mxu0 0
    %1294 = vmatprep.subr.bf16.mxu0 0
    %1295 = vmatpush1.bf16.msra.mxu0 0
    %1296 = vmatprep.subr.bf16.mxu0 0
    %1297 = vmatpush1.bf16.msra.mxu0 0
    %1298 = vmatprep.subr.bf16.mxu0 0
    %1299 = vmatpush1.bf16.msra.mxu0 0
    %1300 = vmatprep.subr.bf16.mxu0 0
    %1301 = vmatpush1.bf16.msra.mxu0 0
    %1302 = vmatprep.subr.bf16.mxu0 0
    %1303 = vmatpush1.bf16.msra.mxu0 0
    %1304 = vmatprep.subr.bf16.mxu0 0
    %1305 = vmatpush1.bf16.msra.mxu0 0
    %1306 = vmatprep.subr.bf16.mxu0 0
    %1307 = vmatpush1.bf16.msra.mxu0 0
    %1308 = vmatprep.subr.bf16.mxu0 0
    %1309 = vmatpush1.bf16.msra.mxu0 0
    %1310 = vmatprep.subr.bf16.mxu0 0
    %1311 = vmatpush1.bf16.msra.mxu0 0
    %1312 = vmatprep.subr.bf16.mxu0 0
    %1313 = vmatpush1.bf16.msra.mxu0 0
    %1314 = vmatprep.mubr.bf16.mxu0 0
    %1315 = vmatmul.mubr.bf16.gmra.mrb[0].mxu0 %v1268
    %v1316 = vpop.f32.mrb[0].mxu0
    %v1317 = vadd.f32 %v1210, %v1316
    %v1318 = vpop.f32.mrb[0].mxu0
    %v1319 = vpop.f32.mrb[0].mxu0
    %v1320 = vadd.f32 %v1215, %v1319
    %v1321 = vpop.f32.mrb[0].mxu0
    %1322 = vmatprep.mubr.bf16.mxu0 0
    %1323 = vmatmul.mubr.bf16.gmra.mrb[0].mxu0 %v1271
    %v1324 = vpop.f32.mrb[0].mxu0
    %v1325 = vadd.f32 %v1220, %v1324
    %v1326 = vpop.f32.mrb[0].mxu0
    %v1327 = vpop.f32.mrb[0].mxu0
    %v1328 = vadd.f32 %v1225, %v1327
    %v1329 = vpop.f32.mrb[0].mxu0
    %1330 = vmatprep.mubr.bf16.mxu0 0
    %1331 = vmatmul.mubr.bf16.gmra.mrb[0].mxu0 %v1274
    %v1332 = vpop.f32.mrb[0].mxu0
    %v1333 = vadd.f32 %v1230, %v1332
    %v1334 = vpop.f32.mrb[0].mxu0
    %v1335 = vpop.f32.mrb[0].mxu0
    %v1336 = vadd.f32 %v1235, %v1335
    %v1337 = vpop.f32.mrb[0].mxu0
    %1338 = vmatprep.mubr.bf16.mxu0 0
    %1339 = vmatmul.mubr.bf16.gmra.mrb[0].mxu0 %v1277
    %v1340 = vpop.f32.mrb[0].mxu0
    %v1341 = vadd.f32 %v1240, %v1340
    %v1342 = vpop.f32.mrb[0].mxu0
    %v1343 = vpop.f32.mrb[0].mxu0
    %v1344 = vadd.f32 %v1245, %v1343
    %v1345 = vpop.f32.mrb[0].mxu0
    %1346 = vdwg.mxu0
    %v1347 = vxor.u32 %v1317, 2147483648
    %v1348 = vxor.u32 %v1320, 2147483648
    %v1349 = vxor.u32 %v1325, 2147483648
    %v1350 = vxor.u32 %v1328, 2147483648
    %v1351 = vxor.u32 %v1333, 2147483648
    %v1352 = vxor.u32 %v1336, 2147483648
    %v1353 = vxor.u32 %v1341, 2147483648
    %v1354 = vxor.u32 %v1344, 2147483648
    %v1355 = vmul.f32 %v1347, 1.442695
    %v1356 = vpow.pop %v1355
    %v1357 = vmul.f32 %v1348, 1.442695
    %v1358 = vpow.pop %v1357
    %v1359 = vmul.f32 %v1349, 1.442695
    %v1360 = vpow.pop %v1359
    %v1361 = vmul.f32 %v1350, 1.442695
    %v1362 = vpow.pop %v1361
    %v1363 = vmul.f32 %v1351, 1.442695
    %v1364 = vpow.pop %v1363
    %v1365 = vmul.f32 %v1352, 1.442695
    %v1366 = vpow.pop %v1365
    %v1367 = vmul.f32 %v1353, 1.442695
    %v1368 = vpow.pop %v1367
    %v1369 = vmul.f32 %v1354, 1.442695
    %v1370 = vpow.pop %v1369
    %v1371 = vadd.f32 %v1356, 1.0
    %v1372 = vadd.f32 %v1358, 1.0
    %v1373 = vadd.f32 %v1360, 1.0
    %v1374 = vadd.f32 %v1362, 1.0
    %v1375 = vadd.f32 %v1364, 1.0
    %v1376 = vadd.f32 %v1366, 1.0
    %v1377 = vadd.f32 %v1368, 1.0
    %v1378 = vadd.f32 %v1370, 1.0
    %v1379 = vrcp.pop %v1371
    %v1380 = vmul.f32 1.0, %v1379
    %v1381 = vrcp.pop %v1372
    %v1382 = vmul.f32 1.0, %v1381
    %v1383 = vrcp.pop %v1373
    %v1384 = vmul.f32 1.0, %v1383
    %v1385 = vrcp.pop %v1374
    %v1386 = vmul.f32 1.0, %v1385
    %v1387 = vrcp.pop %v1375
    %v1388 = vmul.f32 1.0, %v1387
    %v1389 = vrcp.pop %v1376
    %v1390 = vmul.f32 1.0, %v1389
    %v1391 = vrcp.pop %v1377
    %v1392 = vmul.f32 1.0, %v1391
    %v1393 = vrcp.pop %v1378
    %v1394 = vmul.f32 1.0, %v1393
    %v1395 = vmul.f32 %v1317, %v1380
    %v1396 = vmul.f32 %v1320, %v1382
    %v1397 = vmul.f32 %v1325, %v1384
    %v1398 = vmul.f32 %v1328, %v1386
    %v1399 = vmul.f32 %v1333, %v1388
    %v1400 = vmul.f32 %v1336, %v1390
    %v1401 = vmul.f32 %v1341, %v1392
    %v1402 = vmul.f32 %v1344, %v1394
    %v1403 = vld [vmem:[%s18] sm:$0xf]
    %v1404 = vpack.c.bf16 %v1396, %v1395
    %v1405 = vpack.c.bf16 %v1398, %v1397
    %v1406 = vpack.c.bf16 %v1400, %v1399
    %v1407 = vpack.c.bf16 %v1402, %v1401
    %v1408 = vld [vmem:[%s19] sm:$0xff]
    %1410 = vset.pattern.permute.xlu0 0
    %1411 = vperm.xlu0 %1410, %v1408
    %v1412 = vpop.permute.xlu0 %1411
    %v1415 = vsel %vm138, %v1403, 0
    %1417 = vmatprep.subr.bf16.mxu0 0
    %1418 = vmatpush1.bf16.msra.mxu0 %v1404
    %1419 = vmatprep.subr.bf16.mxu0 0
    %1420 = vmatpush1.bf16.msra.mxu0 %v1405
    %1421 = vmatprep.subr.bf16.mxu0 0
    %1422 = vmatpush1.bf16.msra.mxu0 %v1406
    %1423 = vmatprep.subr.bf16.mxu0 0
    %1424 = vmatpush1.bf16.msra.mxu0 %v1407
    %1425 = vmatprep.subr.bf16.mxu0 0
    %1426 = vmatpush1.bf16.msra.mxu0 0
    %1427 = vmatprep.subr.bf16.mxu0 0
    %1428 = vmatpush1.bf16.msra.mxu0 0
    %1429 = vmatprep.subr.bf16.mxu0 0
    %1430 = vmatpush1.bf16.msra.mxu0 0
    %1431 = vmatprep.subr.bf16.mxu0 0
    %1432 = vmatpush1.bf16.msra.mxu0 0
    %1433 = vmatprep.subr.bf16.mxu0 0
    %1434 = vmatpush1.bf16.msra.mxu0 0
    %1435 = vmatprep.subr.bf16.mxu0 0
    %1436 = vmatpush1.bf16.msra.mxu0 0
    %1437 = vmatprep.subr.bf16.mxu0 0
    %1438 = vmatpush1.bf16.msra.mxu0 0
    %1439 = vmatprep.subr.bf16.mxu0 0
    %1440 = vmatpush1.bf16.msra.mxu0 0
    %1441 = vmatprep.subr.bf16.mxu0 0
    %1442 = vmatpush1.bf16.msra.mxu0 0
    %1443 = vmatprep.subr.bf16.mxu0 0
    %1444 = vmatpush1.bf16.msra.mxu0 0
    %1445 = vmatprep.subr.bf16.mxu0 0
    %1446 = vmatpush1.bf16.msra.mxu0 0
    %1447 = vmatprep.subr.bf16.mxu0 0
    %1448 = vmatpush1.bf16.msra.mxu0 0
    %1449 = vmatprep.mubr.bf16.mxu0 0
    %1450 = vmatmul.mubr.bf16.gmra.mrb[0].mxu0 %v1415
    %v1451 = vpop.f32.mrb[0].mxu0
    %v1452 = vadd.f32 %v1412, %v1451
    %v1453 = vpop.f32.mrb[0].mxu0
    %v1454 = vpop.f32.mrb[0].mxu0
    %v1455 = vpop.f32.mrb[0].mxu0
    %1456 = vdwg.mxu0
    %v1457 = vld [vmem:[%s4] sm:$0x3]
    %vm1458 = vcmask 15360
    %v1460 = vsel %vm1458, %v1186, 0
    %v1463 = vsel %vm1458, %v1188, 0
    %v1466 = vsel %vm1458, %v1452, 0
    %v1469 = vsel %vm1132, %v1457, 0
    %1471 = vmatprep.subr.mxu0 0.0
    %1472 = vmatpush1.msra.mxu0 %v1469
    %1473 = vmatprep.subr.mxu0 0.0
    %1474 = vmatpush1.msra.mxu0 0.0
    %1475 = vmatprep.subr.mxu0 0.0
    %1476 = vmatpush1.msra.mxu0 0.0
    %1477 = vmatprep.subr.mxu0 0.0
    %1478 = vmatpush1.msra.mxu0 0.0
    %1479 = vmatprep.subr.mxu0 0.0
    %1480 = vmatpush1.msra.mxu0 0.0
    %1481 = vmatprep.subr.mxu0 0.0
    %1482 = vmatpush1.msra.mxu0 0.0
    %1483 = vmatprep.subr.mxu0 0.0
    %1484 = vmatpush1.msra.mxu0 0.0
    %1485 = vmatprep.subr.mxu0 0.0
    %1486 = vmatpush1.msra.mxu0 0.0
    %1487 = vmatprep.subr.mxu0 0.0
    %1488 = vmatpush1.msra.mxu0 0.0
    %1489 = vmatprep.subr.mxu0 0.0
    %1490 = vmatpush1.msra.mxu0 0.0
    %1491 = vmatprep.subr.mxu0 0.0
    %1492 = vmatpush1.msra.mxu0 0.0
    %1493 = vmatprep.subr.mxu0 0.0
    %1494 = vmatpush1.msra.mxu0 0.0
    %1495 = vmatprep.subr.mxu0 0.0
    %1496 = vmatpush1.msra.mxu0 0.0
    %1497 = vmatprep.subr.mxu0 0.0
    %1498 = vmatpush1.msra.mxu0 0.0
    %1499 = vmatprep.subr.mxu0 0.0
    %1500 = vmatpush1.msra.mxu0 0.0
    %1501 = vmatprep.subr.mxu0 0.0
    %1502 = vmatpush1.msra.mxu0 0.0
    %1503 = vmatprep.subr.mxu0 0.0
    %1504 = vmatpush1.msra.mxu0 0.0
    %1505 = vmatprep.subr.mxu0 0.0
    %1506 = vmatpush1.msra.mxu0 0.0
    %1507 = vmatprep.subr.mxu0 0.0
    %1508 = vmatpush1.msra.mxu0 0.0
    %1509 = vmatprep.subr.mxu0 0.0
    %1510 = vmatpush1.msra.mxu0 0.0
    %1511 = vmatprep.subr.mxu0 0.0
    %1512 = vmatpush1.msra.mxu0 0.0
    %1513 = vmatprep.subr.mxu0 0.0
    %1514 = vmatpush1.msra.mxu0 0.0
    %1515 = vmatprep.subr.mxu0 0.0
    %1516 = vmatpush1.msra.mxu0 0.0
    %1517 = vmatprep.subr.mxu0 0.0
    %1518 = vmatpush1.msra.mxu0 0.0
    %1519 = vmatprep.subr.mxu0 0.0
    %1520 = vmatpush1.msra.mxu0 0.0
    %1521 = vmatprep.subr.mxu0 0.0
    %1522 = vmatpush1.msra.mxu0 0.0
    %1523 = vmatprep.subr.mxu0 0.0
    %1524 = vmatpush1.msra.mxu0 0.0
    %1525 = vmatprep.subr.mxu0 0.0
    %1526 = vmatpush1.msra.mxu0 0.0
    %1527 = vmatprep.subr.mxu0 0.0
    %1528 = vmatpush1.msra.mxu0 0.0
    %1529 = vmatprep.subr.mxu0 0.0
    %1530 = vmatpush1.msra.mxu0 0.0
    %1531 = vmatprep.subr.mxu0 0.0
    %1532 = vmatpush1.msra.mxu0 0.0
    %1533 = vmatprep.subr.mxu0 0.0
    %1534 = vmatpush1.msra.mxu0 0.0
    %1535 = vmatprep.mubr.f32.mxu0 0.0
    %1536 = vmatmul.mubr.f32.gmra.mrb[0].mxu0 %v1460
    %v1537 = vpop.f32.mrb[0].mxu0
    %v1538 = vadd.f32 0.0, %v1537
    %v1539 = vpop.f32.mrb[0].mxu0
    %1540 = vmatprep.mubr.f32.mxu0 0.0
    %1541 = vmatmul.mubr.f32.gmra.mrb[0].mxu0 %v1463
    %v1542 = vpop.f32.mrb[0].mxu0
    %v1543 = vadd.f32 0.0, %v1542
    %v1544 = vpop.f32.mrb[0].mxu0
    %1545 = vmatprep.mubr.f32.mxu0 0.0
    %1546 = vmatmul.mubr.f32.gmra.mrb[0].mxu0 %v1466
    %v1547 = vpop.f32.mrb[0].mxu0
    %v1548 = vadd.f32 0.0, %v1547
    %v1549 = vpop.f32.mrb[0].mxu0
    %1550 = vdwg.mxu0
    %v1551 = vld [vmem:[%s13] sm:$0x3]
    %v1552 = vmul.f32 %v1003, %v1538
    %v1553 = vmul.f32 %v1004, %v1543
    %v1554 = vpack.c.bf16 %v1553, %v1552
    %v1556 = vsel %vm922, %v1551, 0
    %1558 = vmatprep.subr.bf16.mxu0 0
    %1559 = vmatpush1.bf16.msra.mxu0 %v1554
    %1560 = vmatprep.subr.bf16.mxu0 0
    %1561 = vmatpush1.bf16.msra.mxu0 0
    %1562 = vmatprep.subr.bf16.mxu0 0
    %1563 = vmatpush1.bf16.msra.mxu0 0
    %1564 = vmatprep.subr.bf16.mxu0 0
    %1565 = vmatpush1.bf16.msra.mxu0 0
    %1566 = vmatprep.subr.bf16.mxu0 0
    %1567 = vmatpush1.bf16.msra.mxu0 0
    %1568 = vmatprep.subr.bf16.mxu0 0
    %1569 = vmatpush1.bf16.msra.mxu0 0
    %1570 = vmatprep.subr.bf16.mxu0 0
    %1571 = vmatpush1.bf16.msra.mxu0 0
    %1572 = vmatprep.subr.bf16.mxu0 0
    %1573 = vmatpush1.bf16.msra.mxu0 0
    %1574 = vmatprep.subr.bf16.mxu0 0
    %1575 = vmatpush1.bf16.msra.mxu0 0
    %1576 = vmatprep.subr.bf16.mxu0 0
    %1577 = vmatpush1.bf16.msra.mxu0 0
    %1578 = vmatprep.subr.bf16.mxu0 0
    %1579 = vmatpush1.bf16.msra.mxu0 0
    %1580 = vmatprep.subr.bf16.mxu0 0
    %1581 = vmatpush1.bf16.msra.mxu0 0
    %1582 = vmatprep.subr.bf16.mxu0 0
    %1583 = vmatpush1.bf16.msra.mxu0 0
    %1584 = vmatprep.subr.bf16.mxu0 0
    %1585 = vmatpush1.bf16.msra.mxu0 0
    %1586 = vmatprep.subr.bf16.mxu0 0
    %1587 = vmatpush1.bf16.msra.mxu0 0
    %1588 = vmatprep.subr.bf16.mxu0 0
    %1589 = vmatpush1.bf16.msra.mxu0 0
    %1590 = vmatprep.mubr.bf16.mxu0 0
    %1591 = vmatmul.mubr.bf16.gmra.mrb[0].mxu0 %v1556
    %v1592 = vpop.f32.mrb[0].mxu0
    %v1593 = vadd.f32 0.0, %v1592
    %v1594 = vpop.f32.mrb[0].mxu0
    %v1595 = vpop.f32.mrb[0].mxu0
    %v1596 = vpop.f32.mrb[0].mxu0
    %1597 = vdwg.mxu0
    %v1598 = vld [vmem:[%s14] sm:$0xf]
    %v1599 = vld [vmem:[%s15] sm:$0xf]
    %vm1600 = vcmask 257024
    %v1601 = vsel %vm1600, %v1593, 0.0
    %1602 = vadd.xlane.f32.xlu0 %v1601
    %v1603 = vpop.xlane.xlu0 %1602
    %v1604 = vmul.f32 %v1603, %v936
    %v1605 = vmul.f32 %v1593, %v1593
    %v1606 = vsel %vm1600, %v1605, 0.0
    %1607 = vadd.xlane.f32.xlu0 %v1606
    %v1608 = vpop.xlane.xlu0 %1607
    %v1609 = vmul.f32 %v1608, %v936
    %v1610 = vmul.f32 %v1604, %v1604
    %v1611 = vsub.f32 %v1609, %v1610
    %v1612 = vmax.f32 %v1611, 0.0
    %v1613 = vsub.f32 %v1593, %v1604
    %v1614 = vadd.f32 %v1612, 1e-05
    %v1615 = vrsqrt.pop %v1614
    %v1616 = vmul.f32 %v1613, %v1615
    %1618 = vset.pattern.permute.xlu0 0
    %1619 = vperm.xlu0 %1618, %v1598
    %v1620 = vpop.permute.xlu0 %1619
    %v1622 = vmul.f32 %v1616, %v1620
    %1624 = vset.pattern.permute.xlu0 0
    %1625 = vperm.xlu0 %1624, %v1599
    %v1626 = vpop.permute.xlu0 %1625
    %v1628 = vadd.f32 %v1622, %v1626
    %v1629 = vadd.f32 %v1548, 1.0
    %v1630 = vmul.f32 %v1628, %v1629
    %v1632 = vrot.slane %v1548, 4
    %v1634 = vadd.f32 %v1630, %v1632
    %v1636 = vrot.slane %v1634, 1
    %1637 = vrot.lane.b32.xlu0 %v1636, 16
    %v1638 = vpop.permute.xlu0 %1637
    %v1640 = vrot.slane %v1634, 2
    %1641 = vrot.lane.b32.xlu0 %v1640, 32
    %v1642 = vpop.permute.xlu0 %1641
    %v1644 = vrot.slane %v1634, 3
    %1645 = vrot.lane.b32.xlu0 %v1644, 48
    %v1646 = vpop.permute.xlu0 %1645
    %v1648 = vsel %vm922, %v1634, %v1638
    %v1649 = vsel %vm929, %v1648, %v1642
    %vm1650 = vcmask 392192
    %v1651 = vsel %vm1650, %v1649, %v1646
    %1652 = vrot.lane.b32.xlu0 %v1634, 112
    %v1653 = vpop.permute.xlu0 %1652
    %1656 = vrot.lane.b32.xlu0 %v1640, 16
    %v1657 = vpop.permute.xlu0 %1656
    %1659 = vrot.lane.b32.xlu0 %v1644, 32
    %v1660 = vpop.permute.xlu0 %1659
    %v1662 = vsel %vm922, %v1653, %v1636
    %v1663 = vsel %vm929, %v1662, %v1657
    %v1664 = vsel %vm1650, %v1663, %v1660
    %v1666 = vrot.slane %v1664, 7
    %vm1668 = vcmask 1040384
    %v1669 = vsel %vm1668, %v1651, %v1666
    %v1670 = vpack.c.bf16 %v1669, %v1669
    %v1671 = vld [vmem:[%s20] sm:$0xf]
    %v1672 = vld [vmem:[%s20 + $0x4] sm:$0xf]
    %v1673 = vld [vmem:[%s20 + $0x8] sm:$0xf]
    %v1674 = vld [vmem:[%s20 + $0xc] sm:$0xf]
    %v1675 = vld [vmem:[%s20 + $0x10] sm:$0xf]
    %v1676 = vld [vmem:[%s20 + $0x14] sm:$0xf]
    %v1677 = vld [vmem:[%s20 + $0x18] sm:$0xf]
    %v1678 = vld [vmem:[%s20 + $0x1c] sm:$0xf]
    %v1679 = vld [vmem:[%s21] sm:$0x1]
    %v1681 = vlaneseq
    %v1682 = vshrl.u32 %v1681, 7
    %v1683 = vsub.s32 0, %v1682
    %v1684 = vrot.slane %v1679, %v1683
    %v1694 = vunpack.c.l.b16 %v1671
    %v1695 = vunpack.c.l.b16 %v1672
    %v1696 = vunpack.c.l.b16 %v1673
    %v1697 = vunpack.c.l.b16 %v1674
    %v1698 = vunpack.c.l.b16 %v1675
    %v1699 = vunpack.c.l.b16 %v1676
    %v1700 = vunpack.c.l.b16 %v1677
    %v1701 = vunpack.c.l.b16 %v1678
    %v1702 = vpack.c.b16 %v1695, %v1694
    %v1703 = vpack.c.b16 %v1697, %v1696
    %v1704 = vpack.c.b16 %v1699, %v1698
    %v1705 = vpack.c.b16 %v1701, %v1700
    %v1711 = vsel %vm138, %v1670, 0
    %1713 = vmatprep.subr.bf16.mxu0 0
    %1714 = vmatpush1.bf16.msra.mxu0 %v1702
    %1715 = vmatprep.subr.bf16.mxu0 0
    %1716 = vmatpush1.bf16.msra.mxu0 %v1703
    %1717 = vmatprep.subr.bf16.mxu0 0
    %1718 = vmatpush1.bf16.msra.mxu0 %v1704
    %1719 = vmatprep.subr.bf16.mxu0 0
    %1720 = vmatpush1.bf16.msra.mxu0 %v1705
    %1721 = vmatprep.subr.bf16.mxu0 0
    %1722 = vmatpush1.bf16.msra.mxu0 0
    %1723 = vmatprep.subr.bf16.mxu0 0
    %1724 = vmatpush1.bf16.msra.mxu0 0
    %1725 = vmatprep.subr.bf16.mxu0 0
    %1726 = vmatpush1.bf16.msra.mxu0 0
    %1727 = vmatprep.subr.bf16.mxu0 0
    %1728 = vmatpush1.bf16.msra.mxu0 0
    %1729 = vmatprep.subr.bf16.mxu0 0
    %1730 = vmatpush1.bf16.msra.mxu0 0
    %1731 = vmatprep.subr.bf16.mxu0 0
    %1732 = vmatpush1.bf16.msra.mxu0 0
    %1733 = vmatprep.subr.bf16.mxu0 0
    %1734 = vmatpush1.bf16.msra.mxu0 0
    %1735 = vmatprep.subr.bf16.mxu0 0
    %1736 = vmatpush1.bf16.msra.mxu0 0
    %1737 = vmatprep.subr.bf16.mxu0 0
    %1738 = vmatpush1.bf16.msra.mxu0 0
    %1739 = vmatprep.subr.bf16.mxu0 0
    %1740 = vmatpush1.bf16.msra.mxu0 0
    %1741 = vmatprep.subr.bf16.mxu0 0
    %1742 = vmatpush1.bf16.msra.mxu0 0
    %1743 = vmatprep.subr.bf16.mxu0 0
    %1744 = vmatpush1.bf16.msra.mxu0 0
    %1745 = vmatprep.mubr.bf16.mxu0 0
    %1746 = vmatmul.mubr.bf16.gmra.mrb[0].mxu0 %v1711
    %v1747 = vpop.f32.mrb[0].mxu0
    %v1748 = vadd.f32 %v1684, %v1747
    %v1749 = vpop.f32.mrb[0].mxu0
    %v1750 = vpop.f32.mrb[0].mxu0
    %v1751 = vpop.f32.mrb[0].mxu0
    %1752 = vdwg.mxu0
    %vm1753 = vcmask 58368
    %1754 = vst.msk [vmem:[#allocation2] sm:$0x3] %vm1753, %v1748
    // Predicated region
    $region90: #{film_efficientnet_b3.1} parent=1 // pred_check
      _
    $region91: #{film_efficientnet_b3.1} parent=1 // pred_check_branch
      %1756 = sbr.rel (0) target = $region93
    $region92: #{film_efficientnet_b3.1} parent=1 // pred_region
      %s1758 = ssub.s32 32, 32
      %1759 = vsyncadd [#allocation3], %s1758
      %s1761 = sshll.u32 [#allocation2], 4
      %s1762 = int_to_ptr.vmem [resolvable:$true] %s1761
      %1764 = dma.vmem_to_hbm [thread:$0]  %s1762, 32, %s22, [#allocation3]
    $region93: #{film_efficientnet_b3.1} parent=1 // pred_fallthru
      _
    // Predicated region
    $region94: #{film_efficientnet_b3.1} parent=1 // pred_check
      _
    $region95: #{film_efficientnet_b3.1} parent=1 // pred_check_branch
      %1766 = sbr.rel (0) target = $region97
    $region96: #{film_efficientnet_b3.1} parent=1 // pred_region
      %1767 = dma.done [#allocation3], 32
    $region97: #{film_efficientnet_b3.1} parent=1 // pred_fallthru
      _
    %1768 = vsyncpa [#allocation3], 1

</llo_original>
